<compile_context>
chip_gen: v5e
topology: v5e:2x2
jax: 0.10.0
libtpu: 0.0.40
codegen_flags: <defaults>
</compile_context>

<pallas_src>
import math
import functools

import jax
import jax.numpy as jnp
from jax.experimental import pallas as pl
from jax.experimental.pallas import tpu as pltpu


def _forecast_kernel(src_ref,      # (T*B, F)  time-major input, flattened
                     wih_e_ref,    # (F, 4H)   encoder input->gate weights
                     whh_e_ref,    # (H, 4H)   encoder hidden->gate weights
                     whh_d_ref,    # (H, 4H)   decoder hidden->gate weights
                     pack_ref,     # (8, 4H)   packed small params
                     out_ref,      # (B, output_window)
                     *, hidden_size: int, seq_len: int,
                     output_window: int, use_sigmoid: bool):
    H = hidden_size
    T = seq_len
    TB, F = src_ref.shape
    B = TB // T

    wih_e = wih_e_ref[...]
    whh_e = whh_e_ref[...]
    whh_d = whh_d_ref[...]
    pack = pack_ref[...]

    b_e       = pack[0:1, :]            # (1, 4H) encoder gate bias (b_ih + b_hh)
    w_pd      = pack[1:2, :]            # (1, 4H) proj folded into decoder input weights
    b_pd      = pack[2:3, :]            # (1, 4H) proj bias folded into decoder gate bias
    w_att_enc = pack[3:4, 0:H]          # (1, H)  encoder half of attention weights
    w_fc_out  = pack[4:5, 0:H]          # (1, H)  fc weights on decoder output
    w_fc_ctx  = pack[5:6, 0:H]          # (1, H)  fc weights on context
    b_fc      = pack[6:7, 0:1]          # (1, 1)

    def gates_to_hc(gates, c):
        # Full-width activations on the (B, 4H) vreg; PyTorch gate order i, f, g, o.
        s = jax.nn.sigmoid(gates)
        tg = jnp.tanh(gates)
        i = s[:, 0:H]
        f = s[:, H:2 * H]
        o = s[:, 3 * H:4 * H]
        g = tg[:, 2 * H:3 * H]
        c_new = f * c + i * g
        h_new = o * jnp.tanh(c_new)
        return h_new, c_new

    # ---- encoder: input projection hoisted out of the recurrence (one matmul) ----
    src2 = src_ref[...]                                                   # (T*B, F)
    x_e = jnp.dot(src2, wih_e, preferred_element_type=jnp.float32) + b_e  # (T*B, 4H)

    h = jnp.zeros((B, H), jnp.float32)
    c = jnp.zeros((B, H), jnp.float32)
    enc_hs = []
    enc_scores = []
    for t in range(T):
        gates = jnp.dot(h, whh_e, preferred_element_type=jnp.float32) \
            + x_e[t * B:(t + 1) * B, :]
        h, c = gates_to_hc(gates, c)
        enc_hs.append(h)
        # encoder contribution to the attention logits (off the recurrent chain)
        enc_scores.append(jnp.sum(h * w_att_enc, axis=1, keepdims=True))  # (B, 1)

    # ---- attention: decoder-hidden term and the bias are constant over the
    # softmax (time) axis, so they cancel -> weights & context are fixed across
    # decoder steps and computed ONCE here (streaming max/exp/accumulate).
    m = enc_scores[0]
    for t in range(1, T):
        m = jnp.maximum(m, enc_scores[t])
    denom = jnp.zeros((B, 1), jnp.float32)
    ctx_acc = jnp.zeros((B, H), jnp.float32)
    for t in range(T):
        e_t = jnp.exp(enc_scores[t] - m)
        denom = denom + e_t
        ctx_acc = ctx_acc + e_t * enc_hs[t]
    context = ctx_acc / denom                                             # (B, H)

    # fc contribution of the (fixed) context + fc bias, computed once.
    fc_const = jnp.sum(context * w_fc_ctx, axis=1, keepdims=True) + b_fc  # (B, 1)

    # ---- decoder loop (proj folded into the gate weights) ----
    h_d, c_d = h, c                                       # decoder init = encoder final state
    pred = src2[(T - 1) * B:T * B, 0:1]                   # src[:, -1, 0:1] -> (B, 1)
    preds = []
    for _ in range(output_window):
        gates = (pred * w_pd
                 + jnp.dot(h_d, whh_d, preferred_element_type=jnp.float32)
                 + b_pd)
        h_d, c_d = gates_to_hc(gates, c_d)
        pred = jnp.sum(h_d * w_fc_out, axis=1, keepdims=True) + fc_const  # (B, 1)
        if use_sigmoid:
            pred = jax.nn.sigmoid(pred)
        preds.append(pred)

    out_ref[...] = jnp.concatenate(preds, axis=1).astype(out_ref.dtype)   # (B, OW)


def forecast_rnn_att_forward(src, params, *, output_window: int, use_sigmoid: bool = False):
    """src: (B, T, F) float32; params: PyTorch-layout weights. Returns (B, output_window, 1)."""
    B, T, F = src.shape
    H = params["enc_w_hh"].shape[1]
    G = 4 * H

    # ---- glue: layout prep so the kernel does no transposes / tiny DMAs ----
    src2 = jnp.transpose(src, (1, 0, 2)).reshape(T * B, F)        # time-major, flattened
    wih_e = params["enc_w_ih"].T                                  # (F, 4H)
    whh_e = params["enc_w_hh"].T                                  # (H, 4H)
    b_e = (params["enc_b_ih"] + params["enc_b_hh"]).reshape(1, G)
    wih_d = params["dec_w_ih"].T                                  # (F, 4H)
    whh_d = params["dec_w_hh"].T                                  # (H, 4H)
    b_d = (params["dec_b_ih"] + params["dec_b_hh"]).reshape(1, G)

    # Fold the proj layer (Linear 1 -> F) into the decoder input->gate weights.
    w_pd = params["proj_w"].T @ wih_d                             # (1, 4H)
    b_pd = params["proj_b"].reshape(1, F) @ wih_d + b_d           # (1, 4H)

    def row(v):
        v = v.reshape(1, -1).astype(jnp.float32)
        return jnp.pad(v, ((0, 0), (0, G - v.shape[1])))

    # Pack all the small params into one (8, 4H) array -> single DMA.
    # Note: att_b and the decoder half of att_w cancel in the softmax and are dropped.
    pack = jnp.concatenate([
        b_e, w_pd, b_pd,
        row(params["att_w"][:, :H]),      # w_att_enc
        row(params["fc_w"][:, :H]),       # w_fc_out
        row(params["fc_w"][:, H:]),       # w_fc_ctx
        row(params["fc_b"]),              # b_fc at lane 0
        jnp.zeros((1, G), jnp.float32),
    ], axis=0)                            # (8, 4H)

    kernel = functools.partial(_forecast_kernel, hidden_size=H, seq_len=T,
                               output_window=output_window, use_sigmoid=use_sigmoid)
    vmem = pl.BlockSpec(memory_space=pltpu.MemorySpace.VMEM)

    out = pl.pallas_call(
        kernel,
        out_shape=jax.ShapeDtypeStruct((B, output_window), jnp.float32),
        in_specs=[vmem] * 5,
        out_specs=vmem,
    )(src2, wih_e, whh_e, whh_d, pack)

    return out[:, :, None]                                        # (B, OW, 1)


# ---------------- pure-JAX reference (mirrors the PyTorch code exactly) ----------------
def forecast_ref(src, p, output_window, use_sigmoid=False):
    B, T, F = src.shape
    H = p["enc_w_hh"].shape[1]

    def cell(x, h, c, w_ih, w_hh, b_ih, b_hh):
        gates = x @ w_ih.T + b_ih + h @ w_hh.T + b_hh
        i = jax.nn.sigmoid(gates[:, 0:H])
        f = jax.nn.sigmoid(gates[:, H:2 * H])
        g = jnp.tanh(gates[:, 2 * H:3 * H])
        o = jax.nn.sigmoid(gates[:, 3 * H:4 * H])
        c = f * c + i * g
        return o * jnp.tanh(c), c

    h = jnp.zeros((B, H), jnp.float32)
    c = jnp.zeros((B, H), jnp.float32)
    enc = []
    for t in range(T):
        h, c = cell(src[:, t, :], h, c, p["enc_w_ih"], p["enc_w_hh"], p["enc_b_ih"], p["enc_b_hh"])
        enc.append(h)
    enc_out = jnp.stack(enc, axis=1)                        # (B, T, H)

    hd, cd = h, c
    dec_in = src[:, -1:, 0:1]                               # (B, 1, 1)
    outs = []
    for _ in range(output_window):
        x = dec_in[:, 0, :] @ p["proj_w"].T + p["proj_b"]   # (B, F)
        hd, cd = cell(x, hd, cd, p["dec_w_ih"], p["dec_w_hh"], p["dec_b_ih"], p["dec_b_hh"])
        out = hd[:, None, :]                                # (B, 1, H)
        dec_hidden = jnp.tile(out, (1, T, 1))
        attn_in = jnp.concatenate([enc_out, dec_hidden], axis=2)
        scores = attn_in @ p["att_w"].T + p["att_b"]        # (B, T, 1)
        w = jax.nn.softmax(scores, axis=1)
        context = jnp.sum(w * enc_out, axis=1, keepdims=True)
        combined = jnp.concatenate([out, context], axis=2)
        pred = combined @ p["fc_w"].T + p["fc_b"]           # (B, 1, 1)
        if use_sigmoid:
            pred = jax.nn.sigmoid(pred)
        outs.append(pred)
        dec_in = pred
    return jnp.concatenate(outs, axis=1)                    # (B, OW, 1)


if __name__ == "__main__":
    B, T, F, H, OW = 2, 8, 4, 32, 8                         # batch, in-seq, features, hidden, output_window

    key = jax.random.PRNGKey(0)
    ks = jax.random.split(key, 16)
    s = 1.0 / math.sqrt(H)

    def u(k, shape):
        return jax.random.uniform(k, shape, jnp.float32, -s, s)

    params = {
        "enc_w_ih": u(ks[0], (4 * H, F)), "enc_w_hh": u(ks[1], (4 * H, H)),
        "enc_b_ih": u(ks[2], (4 * H,)),   "enc_b_hh": u(ks[3], (4 * H,)),
        "dec_w_ih": u(ks[4], (4 * H, F)), "dec_w_hh": u(ks[5], (4 * H, H)),
        "dec_b_ih": u(ks[6], (4 * H,)),   "dec_b_hh": u(ks[7], (4 * H,)),
        "att_w": u(ks[8], (1, 2 * H)),    "att_b": u(ks[9], (1,)),
        "fc_w": u(ks[10], (1, 2 * H)),    "fc_b": u(ks[11], (1,)),
        "proj_w": u(ks[12], (F, 1)),      "proj_b": u(ks[13], (F,)),
    }
    src = jax.random.normal(ks[14], (B, T, F), dtype=jnp.float32) * 0.5

    out = forecast_rnn_att_forward(src, params, output_window=OW, use_sigmoid=False)
    out = jax.block_until_ready(out)

    ref = forecast_ref(src, params, OW, use_sigmoid=False)
    assert out.shape == (B, OW, 1), out.shape
    assert jnp.allclose(out, ref, atol=2e-3, rtol=2e-3), \
        f"mismatch vs reference: max abs err {jnp.max(jnp.abs(out - ref))}"

    print("KERNEL_OK")
</pallas_src>

<mosaic_0001>
module attributes {stable_mosaic.version = 11 : i64} {
  func.func @_forecast_kernel(%arg0: memref<16x4xf32, #tpu.memory_space<vmem>>, %arg1: memref<4x128xf32, #tpu.memory_space<vmem>>, %arg2: memref<32x128xf32, #tpu.memory_space<vmem>>, %arg3: memref<32x128xf32, #tpu.memory_space<vmem>>, %arg4: memref<8x128xf32, #tpu.memory_space<vmem>>, %arg5: memref<2x8xf32, #tpu.memory_space<vmem>>) attributes {dimension_semantics = [], scalar_prefetch = 0 : i64, scratch_operands = 0 : i64, tpu.core_type = #tpu.core_type<tc>} {
    %c0 = arith.constant 0 : index
    %c0_0 = arith.constant 0 : index
    %0 = vector.load %arg1[%c0, %c0_0] : memref<4x128xf32, #tpu.memory_space<vmem>>, vector<4x128xf32>
    %c0_1 = arith.constant 0 : index
    %c0_2 = arith.constant 0 : index
    %1 = vector.load %arg2[%c0_1, %c0_2] : memref<32x128xf32, #tpu.memory_space<vmem>>, vector<32x128xf32>
    %c0_3 = arith.constant 0 : index
    %c0_4 = arith.constant 0 : index
    %2 = vector.load %arg3[%c0_3, %c0_4] : memref<32x128xf32, #tpu.memory_space<vmem>>, vector<32x128xf32>
    %c0_5 = arith.constant 0 : index
    %c0_6 = arith.constant 0 : index
    %3 = vector.load %arg4[%c0_5, %c0_6] : memref<8x128xf32, #tpu.memory_space<vmem>>, vector<8x128xf32>
    %4 = vector.extract_strided_slice %3 {offsets = [0, 0], sizes = [1, 128], strides = [1, 1]} : vector<8x128xf32> to vector<1x128xf32>
    %5 = vector.extract_strided_slice %3 {offsets = [1, 0], sizes = [1, 128], strides = [1, 1]} : vector<8x128xf32> to vector<1x128xf32>
    %6 = vector.extract_strided_slice %3 {offsets = [2, 0], sizes = [1, 128], strides = [1, 1]} : vector<8x128xf32> to vector<1x128xf32>
    %7 = vector.extract_strided_slice %3 {offsets = [3, 0], sizes = [1, 32], strides = [1, 1]} : vector<8x128xf32> to vector<1x32xf32>
    %8 = vector.extract_strided_slice %3 {offsets = [4, 0], sizes = [1, 32], strides = [1, 1]} : vector<8x128xf32> to vector<1x32xf32>
    %9 = vector.extract_strided_slice %3 {offsets = [5, 0], sizes = [1, 32], strides = [1, 1]} : vector<8x128xf32> to vector<1x32xf32>
    %10 = vector.extract_strided_slice %3 {offsets = [6, 0], sizes = [1, 1], strides = [1, 1]} : vector<8x128xf32> to vector<1x1xf32>
    %c0_7 = arith.constant 0 : index
    %c0_8 = arith.constant 0 : index
    %11 = vector.load %arg0[%c0_7, %c0_8] : memref<16x4xf32, #tpu.memory_space<vmem>>, vector<16x4xf32>
    %cst = arith.constant dense<0.000000e+00> : vector<16x128xf32>
    %12 = tpu.matmul %11, %0, %cst {dimension_numbers = #tpu.dot_dimension_numbers<[1], [0], [0], [1], [0, 0, 1, 1], [], []>} : vector<16x4xf32>, vector<4x128xf32>, vector<16x128xf32> -> vector<16x128xf32>
    %13 = vector.broadcast %4 : vector<1x128xf32> to vector<16x128xf32>
    %14 = arith.addf %12, %13 : vector<16x128xf32>
    %cst_9 = arith.constant 0.000000e+00 : f32
    %15 = vector.broadcast %cst_9 : f32 to vector<2x32xf32>
    %cst_10 = arith.constant 0.000000e+00 : f32
    %16 = vector.broadcast %cst_10 : f32 to vector<2x32xf32>
    %cst_11 = arith.constant dense<0.000000e+00> : vector<2x128xf32>
    %17 = tpu.matmul %15, %1, %cst_11 {dimension_numbers = #tpu.dot_dimension_numbers<[1], [0], [0], [1], [0, 0, 1, 1], [], []>} : vector<2x32xf32>, vector<32x128xf32>, vector<2x128xf32> -> vector<2x128xf32>
    %18 = vector.extract_strided_slice %14 {offsets = [0, 0], sizes = [2, 128], strides = [1, 1]} : vector<16x128xf32> to vector<2x128xf32>
    %19 = arith.addf %17, %18 : vector<2x128xf32>
    %20 = arith.negf %19 : vector<2x128xf32>
    %21 = math.exp %20 : vector<2x128xf32>
    %cst_12 = arith.constant 1.000000e+00 : f32
    %22 = vector.broadcast %cst_12 : f32 to vector<2x128xf32>
    %23 = arith.addf %22, %21 : vector<2x128xf32>
    %24 = arith.divf %22, %23 : vector<2x128xf32>
    %25 = math.tanh %19 : vector<2x128xf32>
    %26 = vector.extract_strided_slice %24 {offsets = [0, 0], sizes = [2, 32], strides = [1, 1]} : vector<2x128xf32> to vector<2x32xf32>
    %27 = vector.extract_strided_slice %24 {offsets = [0, 32], sizes = [2, 32], strides = [1, 1]} : vector<2x128xf32> to vector<2x32xf32>
    %28 = vector.extract_strided_slice %24 {offsets = [0, 96], sizes = [2, 32], strides = [1, 1]} : vector<2x128xf32> to vector<2x32xf32>
    %29 = vector.extract_strided_slice %25 {offsets = [0, 64], sizes = [2, 32], strides = [1, 1]} : vector<2x128xf32> to vector<2x32xf32>
    %30 = arith.mulf %27, %16 : vector<2x32xf32>
    %31 = arith.mulf %26, %29 : vector<2x32xf32>
    %32 = arith.addf %30, %31 : vector<2x32xf32>
    %33 = math.tanh %32 : vector<2x32xf32>
    %34 = arith.mulf %28, %33 : vector<2x32xf32>
    %35 = vector.broadcast %7 : vector<1x32xf32> to vector<2x32xf32>
    %36 = arith.mulf %34, %35 : vector<2x32xf32>
    %cst_13 = arith.constant dense<0.000000e+00> : vector<2xf32>
    %37 = vector.multi_reduction <add>, %36, %cst_13 [1] : vector<2x32xf32> to vector<2xf32>
    %38 = vector.shape_cast %37 : vector<2xf32> to vector<2x1xf32>
    %cst_14 = arith.constant dense<0.000000e+00> : vector<2x128xf32>
    %39 = tpu.matmul %34, %1, %cst_14 {dimension_numbers = #tpu.dot_dimension_numbers<[1], [0], [0], [1], [0, 0, 1, 1], [], []>} : vector<2x32xf32>, vector<32x128xf32>, vector<2x128xf32> -> vector<2x128xf32>
    %40 = vector.extract_strided_slice %14 {offsets = [2, 0], sizes = [2, 128], strides = [1, 1]} : vector<16x128xf32> to vector<2x128xf32>
    %41 = arith.addf %39, %40 : vector<2x128xf32>
    %42 = arith.negf %41 : vector<2x128xf32>
    %43 = math.exp %42 : vector<2x128xf32>
    %cst_15 = arith.constant 1.000000e+00 : f32
    %44 = vector.broadcast %cst_15 : f32 to vector<2x128xf32>
    %45 = arith.addf %44, %43 : vector<2x128xf32>
    %46 = arith.divf %44, %45 : vector<2x128xf32>
    %47 = math.tanh %41 : vector<2x128xf32>
    %48 = vector.extract_strided_slice %46 {offsets = [0, 0], sizes = [2, 32], strides = [1, 1]} : vector<2x128xf32> to vector<2x32xf32>
    %49 = vector.extract_strided_slice %46 {offsets = [0, 32], sizes = [2, 32], strides = [1, 1]} : vector<2x128xf32> to vector<2x32xf32>
    %50 = vector.extract_strided_slice %46 {offsets = [0, 96], sizes = [2, 32], strides = [1, 1]} : vector<2x128xf32> to vector<2x32xf32>
    %51 = vector.extract_strided_slice %47 {offsets = [0, 64], sizes = [2, 32], strides = [1, 1]} : vector<2x128xf32> to vector<2x32xf32>
    %52 = arith.mulf %49, %32 : vector<2x32xf32>
    %53 = arith.mulf %48, %51 : vector<2x32xf32>
    %54 = arith.addf %52, %53 : vector<2x32xf32>
    %55 = math.tanh %54 : vector<2x32xf32>
    %56 = arith.mulf %50, %55 : vector<2x32xf32>
    %57 = vector.broadcast %7 : vector<1x32xf32> to vector<2x32xf32>
    %58 = arith.mulf %56, %57 : vector<2x32xf32>
    %cst_16 = arith.constant dense<0.000000e+00> : vector<2xf32>
    %59 = vector.multi_reduction <add>, %58, %cst_16 [1] : vector<2x32xf32> to vector<2xf32>
    %60 = vector.shape_cast %59 : vector<2xf32> to vector<2x1xf32>
    %cst_17 = arith.constant dense<0.000000e+00> : vector<2x128xf32>
    %61 = tpu.matmul %56, %1, %cst_17 {dimension_numbers = #tpu.dot_dimension_numbers<[1], [0], [0], [1], [0, 0, 1, 1], [], []>} : vector<2x32xf32>, vector<32x128xf32>, vector<2x128xf32> -> vector<2x128xf32>
    %62 = vector.extract_strided_slice %14 {offsets = [4, 0], sizes = [2, 128], strides = [1, 1]} : vector<16x128xf32> to vector<2x128xf32>
    %63 = arith.addf %61, %62 : vector<2x128xf32>
    %64 = arith.negf %63 : vector<2x128xf32>
    %65 = math.exp %64 : vector<2x128xf32>
    %cst_18 = arith.constant 1.000000e+00 : f32
    %66 = vector.broadcast %cst_18 : f32 to vector<2x128xf32>
    %67 = arith.addf %66, %65 : vector<2x128xf32>
    %68 = arith.divf %66, %67 : vector<2x128xf32>
    %69 = math.tanh %63 : vector<2x128xf32>
    %70 = vector.extract_strided_slice %68 {offsets = [0, 0], sizes = [2, 32], strides = [1, 1]} : vector<2x128xf32> to vector<2x32xf32>
    %71 = vector.extract_strided_slice %68 {offsets = [0, 32], sizes = [2, 32], strides = [1, 1]} : vector<2x128xf32> to vector<2x32xf32>
    %72 = vector.extract_strided_slice %68 {offsets = [0, 96], sizes = [2, 32], strides = [1, 1]} : vector<2x128xf32> to vector<2x32xf32>
    %73 = vector.extract_strided_slice %69 {offsets = [0, 64], sizes = [2, 32], strides = [1, 1]} : vector<2x128xf32> to vector<2x32xf32>
    %74 = arith.mulf %71, %54 : vector<2x32xf32>
    %75 = arith.mulf %70, %73 : vector<2x32xf32>
    %76 = arith.addf %74, %75 : vector<2x32xf32>
    %77 = math.tanh %76 : vector<2x32xf32>
    %78 = arith.mulf %72, %77 : vector<2x32xf32>
    %79 = vector.broadcast %7 : vector<1x32xf32> to vector<2x32xf32>
    %80 = arith.mulf %78, %79 : vector<2x32xf32>
    %cst_19 = arith.constant dense<0.000000e+00> : vector<2xf32>
    %81 = vector.multi_reduction <add>, %80, %cst_19 [1] : vector<2x32xf32> to vector<2xf32>
    %82 = vector.shape_cast %81 : vector<2xf32> to vector<2x1xf32>
    %cst_20 = arith.constant dense<0.000000e+00> : vector<2x128xf32>
    %83 = tpu.matmul %78, %1, %cst_20 {dimension_numbers = #tpu.dot_dimension_numbers<[1], [0], [0], [1], [0, 0, 1, 1], [], []>} : vector<2x32xf32>, vector<32x128xf32>, vector<2x128xf32> -> vector<2x128xf32>
    %84 = vector.extract_strided_slice %14 {offsets = [6, 0], sizes = [2, 128], strides = [1, 1]} : vector<16x128xf32> to vector<2x128xf32>
    %85 = arith.addf %83, %84 : vector<2x128xf32>
    %86 = arith.negf %85 : vector<2x128xf32>
    %87 = math.exp %86 : vector<2x128xf32>
    %cst_21 = arith.constant 1.000000e+00 : f32
    %88 = vector.broadcast %cst_21 : f32 to vector<2x128xf32>
    %89 = arith.addf %88, %87 : vector<2x128xf32>
    %90 = arith.divf %88, %89 : vector<2x128xf32>
    %91 = math.tanh %85 : vector<2x128xf32>
    %92 = vector.extract_strided_slice %90 {offsets = [0, 0], sizes = [2, 32], strides = [1, 1]} : vector<2x128xf32> to vector<2x32xf32>
    %93 = vector.extract_strided_slice %90 {offsets = [0, 32], sizes = [2, 32], strides = [1, 1]} : vector<2x128xf32> to vector<2x32xf32>
    %94 = vector.extract_strided_slice %90 {offsets = [0, 96], sizes = [2, 32], strides = [1, 1]} : vector<2x128xf32> to vector<2x32xf32>
    %95 = vector.extract_strided_slice %91 {offsets = [0, 64], sizes = [2, 32], strides = [1, 1]} : vector<2x128xf32> to vector<2x32xf32>
    %96 = arith.mulf %93, %76 : vector<2x32xf32>
    %97 = arith.mulf %92, %95 : vector<2x32xf32>
    %98 = arith.addf %96, %97 : vector<2x32xf32>
    %99 = math.tanh %98 : vector<2x32xf32>
    %100 = arith.mulf %94, %99 : vector<2x32xf32>
    %101 = vector.broadcast %7 : vector<1x32xf32> to vector<2x32xf32>
    %102 = arith.mulf %100, %101 : vector<2x32xf32>
    %cst_22 = arith.constant dense<0.000000e+00> : vector<2xf32>
    %103 = vector.multi_reduction <add>, %102, %cst_22 [1] : vector<2x32xf32> to vector<2xf32>
    %104 = vector.shape_cast %103 : vector<2xf32> to vector<2x1xf32>
    %cst_23 = arith.constant dense<0.000000e+00> : vector<2x128xf32>
    %105 = tpu.matmul %100, %1, %cst_23 {dimension_numbers = #tpu.dot_dimension_numbers<[1], [0], [0], [1], [0, 0, 1, 1], [], []>} : vector<2x32xf32>, vector<32x128xf32>, vector<2x128xf32> -> vector<2x128xf32>
    %106 = vector.extract_strided_slice %14 {offsets = [8, 0], sizes = [2, 128], strides = [1, 1]} : vector<16x128xf32> to vector<2x128xf32>
    %107 = arith.addf %105, %106 : vector<2x128xf32>
    %108 = arith.negf %107 : vector<2x128xf32>
    %109 = math.exp %108 : vector<2x128xf32>
    %cst_24 = arith.constant 1.000000e+00 : f32
    %110 = vector.broadcast %cst_24 : f32 to vector<2x128xf32>
    %111 = arith.addf %110, %109 : vector<2x128xf32>
    %112 = arith.divf %110, %111 : vector<2x128xf32>
    %113 = math.tanh %107 : vector<2x128xf32>
    %114 = vector.extract_strided_slice %112 {offsets = [0, 0], sizes = [2, 32], strides = [1, 1]} : vector<2x128xf32> to vector<2x32xf32>
    %115 = vector.extract_strided_slice %112 {offsets = [0, 32], sizes = [2, 32], strides = [1, 1]} : vector<2x128xf32> to vector<2x32xf32>
    %116 = vector.extract_strided_slice %112 {offsets = [0, 96], sizes = [2, 32], strides = [1, 1]} : vector<2x128xf32> to vector<2x32xf32>
    %117 = vector.extract_strided_slice %113 {offsets = [0, 64], sizes = [2, 32], strides = [1, 1]} : vector<2x128xf32> to vector<2x32xf32>
    %118 = arith.mulf %115, %98 : vector<2x32xf32>
    %119 = arith.mulf %114, %117 : vector<2x32xf32>
    %120 = arith.addf %118, %119 : vector<2x32xf32>
    %121 = math.tanh %120 : vector<2x32xf32>
    %122 = arith.mulf %116, %121 : vector<2x32xf32>
    %123 = vector.broadcast %7 : vector<1x32xf32> to vector<2x32xf32>
    %124 = arith.mulf %122, %123 : vector<2x32xf32>
    %cst_25 = arith.constant dense<0.000000e+00> : vector<2xf32>
    %125 = vector.multi_reduction <add>, %124, %cst_25 [1] : vector<2x32xf32> to vector<2xf32>
    %126 = vector.shape_cast %125 : vector<2xf32> to vector<2x1xf32>
    %cst_26 = arith.constant dense<0.000000e+00> : vector<2x128xf32>
    %127 = tpu.matmul %122, %1, %cst_26 {dimension_numbers = #tpu.dot_dimension_numbers<[1], [0], [0], [1], [0, 0, 1, 1], [], []>} : vector<2x32xf32>, vector<32x128xf32>, vector<2x128xf32> -> vector<2x128xf32>
    %128 = vector.extract_strided_slice %14 {offsets = [10, 0], sizes = [2, 128], strides = [1, 1]} : vector<16x128xf32> to vector<2x128xf32>
    %129 = arith.addf %127, %128 : vector<2x128xf32>
    %130 = arith.negf %129 : vector<2x128xf32>
    %131 = math.exp %130 : vector<2x128xf32>
    %cst_27 = arith.constant 1.000000e+00 : f32
    %132 = vector.broadcast %cst_27 : f32 to vector<2x128xf32>
    %133 = arith.addf %132, %131 : vector<2x128xf32>
    %134 = arith.divf %132, %133 : vector<2x128xf32>
    %135 = math.tanh %129 : vector<2x128xf32>
    %136 = vector.extract_strided_slice %134 {offsets = [0, 0], sizes = [2, 32], strides = [1, 1]} : vector<2x128xf32> to vector<2x32xf32>
    %137 = vector.extract_strided_slice %134 {offsets = [0, 32], sizes = [2, 32], strides = [1, 1]} : vector<2x128xf32> to vector<2x32xf32>
    %138 = vector.extract_strided_slice %134 {offsets = [0, 96], sizes = [2, 32], strides = [1, 1]} : vector<2x128xf32> to vector<2x32xf32>
    %139 = vector.extract_strided_slice %135 {offsets = [0, 64], sizes = [2, 32], strides = [1, 1]} : vector<2x128xf32> to vector<2x32xf32>
    %140 = arith.mulf %137, %120 : vector<2x32xf32>
    %141 = arith.mulf %136, %139 : vector<2x32xf32>
    %142 = arith.addf %140, %141 : vector<2x32xf32>
    %143 = math.tanh %142 : vector<2x32xf32>
    %144 = arith.mulf %138, %143 : vector<2x32xf32>
    %145 = vector.broadcast %7 : vector<1x32xf32> to vector<2x32xf32>
    %146 = arith.mulf %144, %145 : vector<2x32xf32>
    %cst_28 = arith.constant dense<0.000000e+00> : vector<2xf32>
    %147 = vector.multi_reduction <add>, %146, %cst_28 [1] : vector<2x32xf32> to vector<2xf32>
    %148 = vector.shape_cast %147 : vector<2xf32> to vector<2x1xf32>
    %cst_29 = arith.constant dense<0.000000e+00> : vector<2x128xf32>
    %149 = tpu.matmul %144, %1, %cst_29 {dimension_numbers = #tpu.dot_dimension_numbers<[1], [0], [0], [1], [0, 0, 1, 1], [], []>} : vector<2x32xf32>, vector<32x128xf32>, vector<2x128xf32> -> vector<2x128xf32>
    %150 = vector.extract_strided_slice %14 {offsets = [12, 0], sizes = [2, 128], strides = [1, 1]} : vector<16x128xf32> to vector<2x128xf32>
    %151 = arith.addf %149, %150 : vector<2x128xf32>
    %152 = arith.negf %151 : vector<2x128xf32>
    %153 = math.exp %152 : vector<2x128xf32>
    %cst_30 = arith.constant 1.000000e+00 : f32
    %154 = vector.broadcast %cst_30 : f32 to vector<2x128xf32>
    %155 = arith.addf %154, %153 : vector<2x128xf32>
    %156 = arith.divf %154, %155 : vector<2x128xf32>
    %157 = math.tanh %151 : vector<2x128xf32>
    %158 = vector.extract_strided_slice %156 {offsets = [0, 0], sizes = [2, 32], strides = [1, 1]} : vector<2x128xf32> to vector<2x32xf32>
    %159 = vector.extract_strided_slice %156 {offsets = [0, 32], sizes = [2, 32], strides = [1, 1]} : vector<2x128xf32> to vector<2x32xf32>
    %160 = vector.extract_strided_slice %156 {offsets = [0, 96], sizes = [2, 32], strides = [1, 1]} : vector<2x128xf32> to vector<2x32xf32>
    %161 = vector.extract_strided_slice %157 {offsets = [0, 64], sizes = [2, 32], strides = [1, 1]} : vector<2x128xf32> to vector<2x32xf32>
    %162 = arith.mulf %159, %142 : vector<2x32xf32>
    %163 = arith.mulf %158, %161 : vector<2x32xf32>
    %164 = arith.addf %162, %163 : vector<2x32xf32>
    %165 = math.tanh %164 : vector<2x32xf32>
    %166 = arith.mulf %160, %165 : vector<2x32xf32>
    %167 = vector.broadcast %7 : vector<1x32xf32> to vector<2x32xf32>
    %168 = arith.mulf %166, %167 : vector<2x32xf32>
    %cst_31 = arith.constant dense<0.000000e+00> : vector<2xf32>
    %169 = vector.multi_reduction <add>, %168, %cst_31 [1] : vector<2x32xf32> to vector<2xf32>
    %170 = vector.shape_cast %169 : vector<2xf32> to vector<2x1xf32>
    %cst_32 = arith.constant dense<0.000000e+00> : vector<2x128xf32>
    %171 = tpu.matmul %166, %1, %cst_32 {dimension_numbers = #tpu.dot_dimension_numbers<[1], [0], [0], [1], [0, 0, 1, 1], [], []>} : vector<2x32xf32>, vector<32x128xf32>, vector<2x128xf32> -> vector<2x128xf32>
    %172 = vector.extract_strided_slice %14 {offsets = [14, 0], sizes = [2, 128], strides = [1, 1]} : vector<16x128xf32> to vector<2x128xf32>
    %173 = arith.addf %171, %172 : vector<2x128xf32>
    %174 = arith.negf %173 : vector<2x128xf32>
    %175 = math.exp %174 : vector<2x128xf32>
    %cst_33 = arith.constant 1.000000e+00 : f32
    %176 = vector.broadcast %cst_33 : f32 to vector<2x128xf32>
    %177 = arith.addf %176, %175 : vector<2x128xf32>
    %178 = arith.divf %176, %177 : vector<2x128xf32>
    %179 = math.tanh %173 : vector<2x128xf32>
    %180 = vector.extract_strided_slice %178 {offsets = [0, 0], sizes = [2, 32], strides = [1, 1]} : vector<2x128xf32> to vector<2x32xf32>
    %181 = vector.extract_strided_slice %178 {offsets = [0, 32], sizes = [2, 32], strides = [1, 1]} : vector<2x128xf32> to vector<2x32xf32>
    %182 = vector.extract_strided_slice %178 {offsets = [0, 96], sizes = [2, 32], strides = [1, 1]} : vector<2x128xf32> to vector<2x32xf32>
    %183 = vector.extract_strided_slice %179 {offsets = [0, 64], sizes = [2, 32], strides = [1, 1]} : vector<2x128xf32> to vector<2x32xf32>
    %184 = arith.mulf %181, %164 : vector<2x32xf32>
    %185 = arith.mulf %180, %183 : vector<2x32xf32>
    %186 = arith.addf %184, %185 : vector<2x32xf32>
    %187 = math.tanh %186 : vector<2x32xf32>
    %188 = arith.mulf %182, %187 : vector<2x32xf32>
    %189 = vector.broadcast %7 : vector<1x32xf32> to vector<2x32xf32>
    %190 = arith.mulf %188, %189 : vector<2x32xf32>
    %cst_34 = arith.constant dense<0.000000e+00> : vector<2xf32>
    %191 = vector.multi_reduction <add>, %190, %cst_34 [1] : vector<2x32xf32> to vector<2xf32>
    %192 = vector.shape_cast %191 : vector<2xf32> to vector<2x1xf32>
    %193 = arith.maximumf %38, %60 : vector<2x1xf32>
    %194 = arith.maximumf %193, %82 : vector<2x1xf32>
    %195 = arith.maximumf %194, %104 : vector<2x1xf32>
    %196 = arith.maximumf %195, %126 : vector<2x1xf32>
    %197 = arith.maximumf %196, %148 : vector<2x1xf32>
    %198 = arith.maximumf %197, %170 : vector<2x1xf32>
    %199 = arith.maximumf %198, %192 : vector<2x1xf32>
    %cst_35 = arith.constant 0.000000e+00 : f32
    %200 = vector.broadcast %cst_35 : f32 to vector<2x1xf32>
    %cst_36 = arith.constant 0.000000e+00 : f32
    %201 = vector.broadcast %cst_36 : f32 to vector<2x32xf32>
    %202 = arith.subf %38, %199 : vector<2x1xf32>
    %203 = math.exp %202 : vector<2x1xf32>
    %204 = arith.addf %200, %203 : vector<2x1xf32>
    %205 = vector.broadcast %203 : vector<2x1xf32> to vector<2x32xf32>
    %206 = arith.mulf %205, %34 : vector<2x32xf32>
    %207 = arith.addf %201, %206 : vector<2x32xf32>
    %208 = arith.subf %60, %199 : vector<2x1xf32>
    %209 = math.exp %208 : vector<2x1xf32>
    %210 = arith.addf %204, %209 : vector<2x1xf32>
    %211 = vector.broadcast %209 : vector<2x1xf32> to vector<2x32xf32>
    %212 = arith.mulf %211, %56 : vector<2x32xf32>
    %213 = arith.addf %207, %212 : vector<2x32xf32>
    %214 = arith.subf %82, %199 : vector<2x1xf32>
    %215 = math.exp %214 : vector<2x1xf32>
    %216 = arith.addf %210, %215 : vector<2x1xf32>
    %217 = vector.broadcast %215 : vector<2x1xf32> to vector<2x32xf32>
    %218 = arith.mulf %217, %78 : vector<2x32xf32>
    %219 = arith.addf %213, %218 : vector<2x32xf32>
    %220 = arith.subf %104, %199 : vector<2x1xf32>
    %221 = math.exp %220 : vector<2x1xf32>
    %222 = arith.addf %216, %221 : vector<2x1xf32>
    %223 = vector.broadcast %221 : vector<2x1xf32> to vector<2x32xf32>
    %224 = arith.mulf %223, %100 : vector<2x32xf32>
    %225 = arith.addf %219, %224 : vector<2x32xf32>
    %226 = arith.subf %126, %199 : vector<2x1xf32>
    %227 = math.exp %226 : vector<2x1xf32>
    %228 = arith.addf %222, %227 : vector<2x1xf32>
    %229 = vector.broadcast %227 : vector<2x1xf32> to vector<2x32xf32>
    %230 = arith.mulf %229, %122 : vector<2x32xf32>
    %231 = arith.addf %225, %230 : vector<2x32xf32>
    %232 = arith.subf %148, %199 : vector<2x1xf32>
    %233 = math.exp %232 : vector<2x1xf32>
    %234 = arith.addf %228, %233 : vector<2x1xf32>
    %235 = vector.broadcast %233 : vector<2x1xf32> to vector<2x32xf32>
    %236 = arith.mulf %235, %144 : vector<2x32xf32>
    %237 = arith.addf %231, %236 : vector<2x32xf32>
    %238 = arith.subf %170, %199 : vector<2x1xf32>
    %239 = math.exp %238 : vector<2x1xf32>
    %240 = arith.addf %234, %239 : vector<2x1xf32>
    %241 = vector.broadcast %239 : vector<2x1xf32> to vector<2x32xf32>
    %242 = arith.mulf %241, %166 : vector<2x32xf32>
    %243 = arith.addf %237, %242 : vector<2x32xf32>
    %244 = arith.subf %192, %199 : vector<2x1xf32>
    %245 = math.exp %244 : vector<2x1xf32>
    %246 = arith.addf %240, %245 : vector<2x1xf32>
    %247 = vector.broadcast %245 : vector<2x1xf32> to vector<2x32xf32>
    %248 = arith.mulf %247, %188 : vector<2x32xf32>
    %249 = arith.addf %243, %248 : vector<2x32xf32>
    %250 = vector.broadcast %246 : vector<2x1xf32> to vector<2x32xf32>
    %251 = arith.divf %249, %250 : vector<2x32xf32>
    %252 = vector.broadcast %9 : vector<1x32xf32> to vector<2x32xf32>
    %253 = arith.mulf %251, %252 : vector<2x32xf32>
    %cst_37 = arith.constant dense<0.000000e+00> : vector<2xf32>
    %254 = vector.multi_reduction <add>, %253, %cst_37 [1] : vector<2x32xf32> to vector<2xf32>
    %255 = vector.shape_cast %254 : vector<2xf32> to vector<2x1xf32>
    %256 = vector.broadcast %10 : vector<1x1xf32> to vector<2x1xf32>
    %257 = arith.addf %255, %256 : vector<2x1xf32>
    %258 = vector.extract_strided_slice %11 {offsets = [14, 0], sizes = [2, 1], strides = [1, 1]} : vector<16x4xf32> to vector<2x1xf32>
    %259 = vector.broadcast %258 : vector<2x1xf32> to vector<2x128xf32>
    %260 = vector.broadcast %5 : vector<1x128xf32> to vector<2x128xf32>
    %261 = arith.mulf %259, %260 : vector<2x128xf32>
    %cst_38 = arith.constant dense<0.000000e+00> : vector<2x128xf32>
    %262 = tpu.matmul %188, %2, %cst_38 {dimension_numbers = #tpu.dot_dimension_numbers<[1], [0], [0], [1], [0, 0, 1, 1], [], []>} : vector<2x32xf32>, vector<32x128xf32>, vector<2x128xf32> -> vector<2x128xf32>
    %263 = arith.addf %261, %262 : vector<2x128xf32>
    %264 = vector.broadcast %6 : vector<1x128xf32> to vector<2x128xf32>
    %265 = arith.addf %263, %264 : vector<2x128xf32>
    %266 = arith.negf %265 : vector<2x128xf32>
    %267 = math.exp %266 : vector<2x128xf32>
    %cst_39 = arith.constant 1.000000e+00 : f32
    %268 = vector.broadcast %cst_39 : f32 to vector<2x128xf32>
    %269 = arith.addf %268, %267 : vector<2x128xf32>
    %270 = arith.divf %268, %269 : vector<2x128xf32>
    %271 = math.tanh %265 : vector<2x128xf32>
    %272 = vector.extract_strided_slice %270 {offsets = [0, 0], sizes = [2, 32], strides = [1, 1]} : vector<2x128xf32> to vector<2x32xf32>
    %273 = vector.extract_strided_slice %270 {offsets = [0, 32], sizes = [2, 32], strides = [1, 1]} : vector<2x128xf32> to vector<2x32xf32>
    %274 = vector.extract_strided_slice %270 {offsets = [0, 96], sizes = [2, 32], strides = [1, 1]} : vector<2x128xf32> to vector<2x32xf32>
    %275 = vector.extract_strided_slice %271 {offsets = [0, 64], sizes = [2, 32], strides = [1, 1]} : vector<2x128xf32> to vector<2x32xf32>
    %276 = arith.mulf %273, %186 : vector<2x32xf32>
    %277 = arith.mulf %272, %275 : vector<2x32xf32>
    %278 = arith.addf %276, %277 : vector<2x32xf32>
    %279 = math.tanh %278 : vector<2x32xf32>
    %280 = arith.mulf %274, %279 : vector<2x32xf32>
    %281 = vector.broadcast %8 : vector<1x32xf32> to vector<2x32xf32>
    %282 = arith.mulf %280, %281 : vector<2x32xf32>
    %cst_40 = arith.constant dense<0.000000e+00> : vector<2xf32>
    %283 = vector.multi_reduction <add>, %282, %cst_40 [1] : vector<2x32xf32> to vector<2xf32>
    %284 = vector.shape_cast %283 : vector<2xf32> to vector<2x1xf32>
    %285 = arith.addf %284, %257 : vector<2x1xf32>
    %286 = vector.broadcast %285 : vector<2x1xf32> to vector<2x128xf32>
    %287 = vector.broadcast %5 : vector<1x128xf32> to vector<2x128xf32>
    %288 = arith.mulf %286, %287 : vector<2x128xf32>
    %cst_41 = arith.constant dense<0.000000e+00> : vector<2x128xf32>
    %289 = tpu.matmul %280, %2, %cst_41 {dimension_numbers = #tpu.dot_dimension_numbers<[1], [0], [0], [1], [0, 0, 1, 1], [], []>} : vector<2x32xf32>, vector<32x128xf32>, vector<2x128xf32> -> vector<2x128xf32>
    %290 = arith.addf %288, %289 : vector<2x128xf32>
    %291 = vector.broadcast %6 : vector<1x128xf32> to vector<2x128xf32>
    %292 = arith.addf %290, %291 : vector<2x128xf32>
    %293 = arith.negf %292 : vector<2x128xf32>
    %294 = math.exp %293 : vector<2x128xf32>
    %cst_42 = arith.constant 1.000000e+00 : f32
    %295 = vector.broadcast %cst_42 : f32 to vector<2x128xf32>
    %296 = arith.addf %295, %294 : vector<2x128xf32>
    %297 = arith.divf %295, %296 : vector<2x128xf32>
    %298 = math.tanh %292 : vector<2x128xf32>
    %299 = vector.extract_strided_slice %297 {offsets = [0, 0], sizes = [2, 32], strides = [1, 1]} : vector<2x128xf32> to vector<2x32xf32>
    %300 = vector.extract_strided_slice %297 {offsets = [0, 32], sizes = [2, 32], strides = [1, 1]} : vector<2x128xf32> to vector<2x32xf32>
    %301 = vector.extract_strided_slice %297 {offsets = [0, 96], sizes = [2, 32], strides = [1, 1]} : vector<2x128xf32> to vector<2x32xf32>
    %302 = vector.extract_strided_slice %298 {offsets = [0, 64], sizes = [2, 32], strides = [1, 1]} : vector<2x128xf32> to vector<2x32xf32>
    %303 = arith.mulf %300, %278 : vector<2x32xf32>
    %304 = arith.mulf %299, %302 : vector<2x32xf32>
    %305 = arith.addf %303, %304 : vector<2x32xf32>
    %306 = math.tanh %305 : vector<2x32xf32>
    %307 = arith.mulf %301, %306 : vector<2x32xf32>
    %308 = vector.broadcast %8 : vector<1x32xf32> to vector<2x32xf32>
    %309 = arith.mulf %307, %308 : vector<2x32xf32>
    %cst_43 = arith.constant dense<0.000000e+00> : vector<2xf32>
    %310 = vector.multi_reduction <add>, %309, %cst_43 [1] : vector<2x32xf32> to vector<2xf32>
    %311 = vector.shape_cast %310 : vector<2xf32> to vector<2x1xf32>
    %312 = arith.addf %311, %257 : vector<2x1xf32>
    %313 = vector.broadcast %312 : vector<2x1xf32> to vector<2x128xf32>
    %314 = vector.broadcast %5 : vector<1x128xf32> to vector<2x128xf32>
    %315 = arith.mulf %313, %314 : vector<2x128xf32>
    %cst_44 = arith.constant dense<0.000000e+00> : vector<2x128xf32>
    %316 = tpu.matmul %307, %2, %cst_44 {dimension_numbers = #tpu.dot_dimension_numbers<[1], [0], [0], [1], [0, 0, 1, 1], [], []>} : vector<2x32xf32>, vector<32x128xf32>, vector<2x128xf32> -> vector<2x128xf32>
    %317 = arith.addf %315, %316 : vector<2x128xf32>
    %318 = vector.broadcast %6 : vector<1x128xf32> to vector<2x128xf32>
    %319 = arith.addf %317, %318 : vector<2x128xf32>
    %320 = arith.negf %319 : vector<2x128xf32>
    %321 = math.exp %320 : vector<2x128xf32>
    %cst_45 = arith.constant 1.000000e+00 : f32
    %322 = vector.broadcast %cst_45 : f32 to vector<2x128xf32>
    %323 = arith.addf %322, %321 : vector<2x128xf32>
    %324 = arith.divf %322, %323 : vector<2x128xf32>
    %325 = math.tanh %319 : vector<2x128xf32>
    %326 = vector.extract_strided_slice %324 {offsets = [0, 0], sizes = [2, 32], strides = [1, 1]} : vector<2x128xf32> to vector<2x32xf32>
    %327 = vector.extract_strided_slice %324 {offsets = [0, 32], sizes = [2, 32], strides = [1, 1]} : vector<2x128xf32> to vector<2x32xf32>
    %328 = vector.extract_strided_slice %324 {offsets = [0, 96], sizes = [2, 32], strides = [1, 1]} : vector<2x128xf32> to vector<2x32xf32>
    %329 = vector.extract_strided_slice %325 {offsets = [0, 64], sizes = [2, 32], strides = [1, 1]} : vector<2x128xf32> to vector<2x32xf32>
    %330 = arith.mulf %327, %305 : vector<2x32xf32>
    %331 = arith.mulf %326, %329 : vector<2x32xf32>
    %332 = arith.addf %330, %331 : vector<2x32xf32>
    %333 = math.tanh %332 : vector<2x32xf32>
    %334 = arith.mulf %328, %333 : vector<2x32xf32>
    %335 = vector.broadcast %8 : vector<1x32xf32> to vector<2x32xf32>
    %336 = arith.mulf %334, %335 : vector<2x32xf32>
    %cst_46 = arith.constant dense<0.000000e+00> : vector<2xf32>
    %337 = vector.multi_reduction <add>, %336, %cst_46 [1] : vector<2x32xf32> to vector<2xf32>
    %338 = vector.shape_cast %337 : vector<2xf32> to vector<2x1xf32>
    %339 = arith.addf %338, %257 : vector<2x1xf32>
    %340 = vector.broadcast %339 : vector<2x1xf32> to vector<2x128xf32>
    %341 = vector.broadcast %5 : vector<1x128xf32> to vector<2x128xf32>
    %342 = arith.mulf %340, %341 : vector<2x128xf32>
    %cst_47 = arith.constant dense<0.000000e+00> : vector<2x128xf32>
    %343 = tpu.matmul %334, %2, %cst_47 {dimension_numbers = #tpu.dot_dimension_numbers<[1], [0], [0], [1], [0, 0, 1, 1], [], []>} : vector<2x32xf32>, vector<32x128xf32>, vector<2x128xf32> -> vector<2x128xf32>
    %344 = arith.addf %342, %343 : vector<2x128xf32>
    %345 = vector.broadcast %6 : vector<1x128xf32> to vector<2x128xf32>
    %346 = arith.addf %344, %345 : vector<2x128xf32>
    %347 = arith.negf %346 : vector<2x128xf32>
    %348 = math.exp %347 : vector<2x128xf32>
    %cst_48 = arith.constant 1.000000e+00 : f32
    %349 = vector.broadcast %cst_48 : f32 to vector<2x128xf32>
    %350 = arith.addf %349, %348 : vector<2x128xf32>
    %351 = arith.divf %349, %350 : vector<2x128xf32>
    %352 = math.tanh %346 : vector<2x128xf32>
    %353 = vector.extract_strided_slice %351 {offsets = [0, 0], sizes = [2, 32], strides = [1, 1]} : vector<2x128xf32> to vector<2x32xf32>
    %354 = vector.extract_strided_slice %351 {offsets = [0, 32], sizes = [2, 32], strides = [1, 1]} : vector<2x128xf32> to vector<2x32xf32>
    %355 = vector.extract_strided_slice %351 {offsets = [0, 96], sizes = [2, 32], strides = [1, 1]} : vector<2x128xf32> to vector<2x32xf32>
    %356 = vector.extract_strided_slice %352 {offsets = [0, 64], sizes = [2, 32], strides = [1, 1]} : vector<2x128xf32> to vector<2x32xf32>
    %357 = arith.mulf %354, %332 : vector<2x32xf32>
    %358 = arith.mulf %353, %356 : vector<2x32xf32>
    %359 = arith.addf %357, %358 : vector<2x32xf32>
    %360 = math.tanh %359 : vector<2x32xf32>
    %361 = arith.mulf %355, %360 : vector<2x32xf32>
    %362 = vector.broadcast %8 : vector<1x32xf32> to vector<2x32xf32>
    %363 = arith.mulf %361, %362 : vector<2x32xf32>
    %cst_49 = arith.constant dense<0.000000e+00> : vector<2xf32>
    %364 = vector.multi_reduction <add>, %363, %cst_49 [1] : vector<2x32xf32> to vector<2xf32>
    %365 = vector.shape_cast %364 : vector<2xf32> to vector<2x1xf32>
    %366 = arith.addf %365, %257 : vector<2x1xf32>
    %367 = vector.broadcast %366 : vector<2x1xf32> to vector<2x128xf32>
    %368 = vector.broadcast %5 : vector<1x128xf32> to vector<2x128xf32>
    %369 = arith.mulf %367, %368 : vector<2x128xf32>
    %cst_50 = arith.constant dense<0.000000e+00> : vector<2x128xf32>
    %370 = tpu.matmul %361, %2, %cst_50 {dimension_numbers = #tpu.dot_dimension_numbers<[1], [0], [0], [1], [0, 0, 1, 1], [], []>} : vector<2x32xf32>, vector<32x128xf32>, vector<2x128xf32> -> vector<2x128xf32>
    %371 = arith.addf %369, %370 : vector<2x128xf32>
    %372 = vector.broadcast %6 : vector<1x128xf32> to vector<2x128xf32>
    %373 = arith.addf %371, %372 : vector<2x128xf32>
    %374 = arith.negf %373 : vector<2x128xf32>
    %375 = math.exp %374 : vector<2x128xf32>
    %cst_51 = arith.constant 1.000000e+00 : f32
    %376 = vector.broadcast %cst_51 : f32 to vector<2x128xf32>
    %377 = arith.addf %376, %375 : vector<2x128xf32>
    %378 = arith.divf %376, %377 : vector<2x128xf32>
    %379 = math.tanh %373 : vector<2x128xf32>
    %380 = vector.extract_strided_slice %378 {offsets = [0, 0], sizes = [2, 32], strides = [1, 1]} : vector<2x128xf32> to vector<2x32xf32>
    %381 = vector.extract_strided_slice %378 {offsets = [0, 32], sizes = [2, 32], strides = [1, 1]} : vector<2x128xf32> to vector<2x32xf32>
    %382 = vector.extract_strided_slice %378 {offsets = [0, 96], sizes = [2, 32], strides = [1, 1]} : vector<2x128xf32> to vector<2x32xf32>
    %383 = vector.extract_strided_slice %379 {offsets = [0, 64], sizes = [2, 32], strides = [1, 1]} : vector<2x128xf32> to vector<2x32xf32>
    %384 = arith.mulf %381, %359 : vector<2x32xf32>
    %385 = arith.mulf %380, %383 : vector<2x32xf32>
    %386 = arith.addf %384, %385 : vector<2x32xf32>
    %387 = math.tanh %386 : vector<2x32xf32>
    %388 = arith.mulf %382, %387 : vector<2x32xf32>
    %389 = vector.broadcast %8 : vector<1x32xf32> to vector<2x32xf32>
    %390 = arith.mulf %388, %389 : vector<2x32xf32>
    %cst_52 = arith.constant dense<0.000000e+00> : vector<2xf32>
    %391 = vector.multi_reduction <add>, %390, %cst_52 [1] : vector<2x32xf32> to vector<2xf32>
    %392 = vector.shape_cast %391 : vector<2xf32> to vector<2x1xf32>
    %393 = arith.addf %392, %257 : vector<2x1xf32>
    %394 = vector.broadcast %393 : vector<2x1xf32> to vector<2x128xf32>
    %395 = vector.broadcast %5 : vector<1x128xf32> to vector<2x128xf32>
    %396 = arith.mulf %394, %395 : vector<2x128xf32>
    %cst_53 = arith.constant dense<0.000000e+00> : vector<2x128xf32>
    %397 = tpu.matmul %388, %2, %cst_53 {dimension_numbers = #tpu.dot_dimension_numbers<[1], [0], [0], [1], [0, 0, 1, 1], [], []>} : vector<2x32xf32>, vector<32x128xf32>, vector<2x128xf32> -> vector<2x128xf32>
    %398 = arith.addf %396, %397 : vector<2x128xf32>
    %399 = vector.broadcast %6 : vector<1x128xf32> to vector<2x128xf32>
    %400 = arith.addf %398, %399 : vector<2x128xf32>
    %401 = arith.negf %400 : vector<2x128xf32>
    %402 = math.exp %401 : vector<2x128xf32>
    %cst_54 = arith.constant 1.000000e+00 : f32
    %403 = vector.broadcast %cst_54 : f32 to vector<2x128xf32>
    %404 = arith.addf %403, %402 : vector<2x128xf32>
    %405 = arith.divf %403, %404 : vector<2x128xf32>
    %406 = math.tanh %400 : vector<2x128xf32>
    %407 = vector.extract_strided_slice %405 {offsets = [0, 0], sizes = [2, 32], strides = [1, 1]} : vector<2x128xf32> to vector<2x32xf32>
    %408 = vector.extract_strided_slice %405 {offsets = [0, 32], sizes = [2, 32], strides = [1, 1]} : vector<2x128xf32> to vector<2x32xf32>
    %409 = vector.extract_strided_slice %405 {offsets = [0, 96], sizes = [2, 32], strides = [1, 1]} : vector<2x128xf32> to vector<2x32xf32>
    %410 = vector.extract_strided_slice %406 {offsets = [0, 64], sizes = [2, 32], strides = [1, 1]} : vector<2x128xf32> to vector<2x32xf32>
    %411 = arith.mulf %408, %386 : vector<2x32xf32>
    %412 = arith.mulf %407, %410 : vector<2x32xf32>
    %413 = arith.addf %411, %412 : vector<2x32xf32>
    %414 = math.tanh %413 : vector<2x32xf32>
    %415 = arith.mulf %409, %414 : vector<2x32xf32>
    %416 = vector.broadcast %8 : vector<1x32xf32> to vector<2x32xf32>
    %417 = arith.mulf %415, %416 : vector<2x32xf32>
    %cst_55 = arith.constant dense<0.000000e+00> : vector<2xf32>
    %418 = vector.multi_reduction <add>, %417, %cst_55 [1] : vector<2x32xf32> to vector<2xf32>
    %419 = vector.shape_cast %418 : vector<2xf32> to vector<2x1xf32>
    %420 = arith.addf %419, %257 : vector<2x1xf32>
    %421 = vector.broadcast %420 : vector<2x1xf32> to vector<2x128xf32>
    %422 = vector.broadcast %5 : vector<1x128xf32> to vector<2x128xf32>
    %423 = arith.mulf %421, %422 : vector<2x128xf32>
    %cst_56 = arith.constant dense<0.000000e+00> : vector<2x128xf32>
    %424 = tpu.matmul %415, %2, %cst_56 {dimension_numbers = #tpu.dot_dimension_numbers<[1], [0], [0], [1], [0, 0, 1, 1], [], []>} : vector<2x32xf32>, vector<32x128xf32>, vector<2x128xf32> -> vector<2x128xf32>
    %425 = arith.addf %423, %424 : vector<2x128xf32>
    %426 = vector.broadcast %6 : vector<1x128xf32> to vector<2x128xf32>
    %427 = arith.addf %425, %426 : vector<2x128xf32>
    %428 = arith.negf %427 : vector<2x128xf32>
    %429 = math.exp %428 : vector<2x128xf32>
    %cst_57 = arith.constant 1.000000e+00 : f32
    %430 = vector.broadcast %cst_57 : f32 to vector<2x128xf32>
    %431 = arith.addf %430, %429 : vector<2x128xf32>
    %432 = arith.divf %430, %431 : vector<2x128xf32>
    %433 = math.tanh %427 : vector<2x128xf32>
    %434 = vector.extract_strided_slice %432 {offsets = [0, 0], sizes = [2, 32], strides = [1, 1]} : vector<2x128xf32> to vector<2x32xf32>
    %435 = vector.extract_strided_slice %432 {offsets = [0, 32], sizes = [2, 32], strides = [1, 1]} : vector<2x128xf32> to vector<2x32xf32>
    %436 = vector.extract_strided_slice %432 {offsets = [0, 96], sizes = [2, 32], strides = [1, 1]} : vector<2x128xf32> to vector<2x32xf32>
    %437 = vector.extract_strided_slice %433 {offsets = [0, 64], sizes = [2, 32], strides = [1, 1]} : vector<2x128xf32> to vector<2x32xf32>
    %438 = arith.mulf %435, %413 : vector<2x32xf32>
    %439 = arith.mulf %434, %437 : vector<2x32xf32>
    %440 = arith.addf %438, %439 : vector<2x32xf32>
    %441 = math.tanh %440 : vector<2x32xf32>
    %442 = arith.mulf %436, %441 : vector<2x32xf32>
    %443 = vector.broadcast %8 : vector<1x32xf32> to vector<2x32xf32>
    %444 = arith.mulf %442, %443 : vector<2x32xf32>
    %cst_58 = arith.constant dense<0.000000e+00> : vector<2xf32>
    %445 = vector.multi_reduction <add>, %444, %cst_58 [1] : vector<2x32xf32> to vector<2xf32>
    %446 = vector.shape_cast %445 : vector<2xf32> to vector<2x1xf32>
    %447 = arith.addf %446, %257 : vector<2x1xf32>
    %448 = vector.broadcast %447 : vector<2x1xf32> to vector<2x128xf32>
    %449 = vector.broadcast %5 : vector<1x128xf32> to vector<2x128xf32>
    %450 = arith.mulf %448, %449 : vector<2x128xf32>
    %cst_59 = arith.constant dense<0.000000e+00> : vector<2x128xf32>
    %451 = tpu.matmul %442, %2, %cst_59 {dimension_numbers = #tpu.dot_dimension_numbers<[1], [0], [0], [1], [0, 0, 1, 1], [], []>} : vector<2x32xf32>, vector<32x128xf32>, vector<2x128xf32> -> vector<2x128xf32>
    %452 = arith.addf %450, %451 : vector<2x128xf32>
    %453 = vector.broadcast %6 : vector<1x128xf32> to vector<2x128xf32>
    %454 = arith.addf %452, %453 : vector<2x128xf32>
    %455 = arith.negf %454 : vector<2x128xf32>
    %456 = math.exp %455 : vector<2x128xf32>
    %cst_60 = arith.constant 1.000000e+00 : f32
    %457 = vector.broadcast %cst_60 : f32 to vector<2x128xf32>
    %458 = arith.addf %457, %456 : vector<2x128xf32>
    %459 = arith.divf %457, %458 : vector<2x128xf32>
    %460 = math.tanh %454 : vector<2x128xf32>
    %461 = vector.extract_strided_slice %459 {offsets = [0, 0], sizes = [2, 32], strides = [1, 1]} : vector<2x128xf32> to vector<2x32xf32>
    %462 = vector.extract_strided_slice %459 {offsets = [0, 32], sizes = [2, 32], strides = [1, 1]} : vector<2x128xf32> to vector<2x32xf32>
    %463 = vector.extract_strided_slice %459 {offsets = [0, 96], sizes = [2, 32], strides = [1, 1]} : vector<2x128xf32> to vector<2x32xf32>
    %464 = vector.extract_strided_slice %460 {offsets = [0, 64], sizes = [2, 32], strides = [1, 1]} : vector<2x128xf32> to vector<2x32xf32>
    %465 = arith.mulf %462, %440 : vector<2x32xf32>
    %466 = arith.mulf %461, %464 : vector<2x32xf32>
    %467 = arith.addf %465, %466 : vector<2x32xf32>
    %468 = math.tanh %467 : vector<2x32xf32>
    %469 = arith.mulf %463, %468 : vector<2x32xf32>
    %470 = vector.broadcast %8 : vector<1x32xf32> to vector<2x32xf32>
    %471 = arith.mulf %469, %470 : vector<2x32xf32>
    %cst_61 = arith.constant dense<0.000000e+00> : vector<2xf32>
    %472 = vector.multi_reduction <add>, %471, %cst_61 [1] : vector<2x32xf32> to vector<2xf32>
    %473 = vector.shape_cast %472 : vector<2xf32> to vector<2x1xf32>
    %474 = arith.addf %473, %257 : vector<2x1xf32>
    %475 = tpu.concatenate %285, %312, %339, %366, %393, %420, %447, %474 in 1 : vector<2x1xf32>, vector<2x1xf32>, vector<2x1xf32>, vector<2x1xf32>, vector<2x1xf32>, vector<2x1xf32>, vector<2x1xf32>, vector<2x1xf32> -> vector<2x8xf32>
    %c0_62 = arith.constant 0 : index
    %c0_63 = arith.constant 0 : index
    %476 = vector.load %arg5[%c0_62, %c0_63] : memref<2x8xf32, #tpu.memory_space<vmem>>, vector<2x8xf32>
    tpu.vector_store %arg5[%c0_62, %c0_63], %475 {strides = array<i32>} : memref<2x8xf32, #tpu.memory_space<vmem>>, vector<2x8xf32>,
    return
  }
}

</mosaic_0001>

<llo_original>
// kernel: tpu_custom_call.1
$region0: #{tpu_custom_call.1}
  #allocation0 [shape = 'u32[]', space=smem, size = 0x4, offset = 0x4, fixed_abs, tag = 'smem constant byte address 0x4 - core index']
  #allocation1 [shape = 'u32[72,128]{1,0:T(1,128)}', space=vmem, size = 0x9000, scoped, tag = 'internal scratch']
  %s0 = inlined_call_operand.vmem [shape: f32[16,4], index: 0, kind: input, shape index: {}]
  %s1 = inlined_call_operand.vmem [shape: f32[4,128], index: 1, kind: input, shape index: {}]
  %s2 = inlined_call_operand.hbm [shape: f32[32,128], index: 2, kind: input, shape index: {}]
  %s3 = inlined_call_operand.hbm [shape: f32[32,128], index: 3, kind: input, shape index: {}]
  %s4 = inlined_call_operand.vmem [shape: f32[8,128], index: 4, kind: input, shape index: {}]
  %s5 = inlined_call_operand.hbm [shape: f32[2,8], index: 5, kind: output, shape index: {}]
  %s6 = sld [smem:[#allocation0]]
  $region38: #{tpu_custom_call.1} parent=0
    _
  %s8 = ssub.s32 1, %s6
  %s9 = scalar_select 0, %s8, %s6
  $region1: #{tpu_custom_call.1} parent=0
    #allocation2 [shape = 'u8[16384]{0}', space=vmem, size = 0x4000, scoped, tag = 'input window, operand 2, single buffered']
    #allocation3 [shape = 's32[1]{0}', space=sflag, size = 0x4, scoped, tag = 'scoped memory for tpu_custom_call.1']
    #allocation4 [shape = 's32[1]{0}', space=sflag, size = 0x4, scoped, tag = 'scoped memory for tpu_custom_call.1']
    #allocation5 [shape = 'u8[16384]{0}', space=vmem, size = 0x4000, scoped, tag = 'input window, operand 3, single buffered']
    #allocation6 [shape = 's32[1]{0}', space=sflag, size = 0x4, scoped, tag = 'scoped memory for tpu_custom_call.1']
    #allocation7 [shape = 'u8[1024]{0}', space=vmem, size = 0x400, scoped, tag = 'output window, operand 0, single buffered']
    %10 = vsyncpa [#allocation3], 0
    %11 = vsyncpa [#allocation6], 0
    %12 = vsyncpa [#allocation4], 0
    // Predicated region
    $region2: #{tpu_custom_call.1} parent=1 // pred_check
      _
    $region3: #{tpu_custom_call.1} parent=1 // pred_check_branch
      %14 = sbr.rel (0) target = $region5
    $region4: #{tpu_custom_call.1} parent=1 // pred_region
      _
    $region5: #{tpu_custom_call.1} parent=1 // pred_fallthru
      _
    // Predicated region
    $region6: #{tpu_custom_call.1} parent=1 // pred_check
      _
    $region7: #{tpu_custom_call.1} parent=1 // pred_check_branch
      %16 = sbr.rel (0) target = $region9
    $region8: #{tpu_custom_call.1} parent=1 // pred_region
      _
    $region9: #{tpu_custom_call.1} parent=1 // pred_fallthru
      _
    // Predicated region
    $region10: #{tpu_custom_call.1} parent=1 // pred_check
      _
    $region11: #{tpu_custom_call.1} parent=1 // pred_check_branch
      %18 = sbr.rel (0) target = $region13
    $region12: #{tpu_custom_call.1} parent=1 // pred_region
      %20 = vsyncadd [#allocation3], 0
      %s21 = sshll.u32 %s2, 4
      %s22 = int_to_ptr.hbm [resolvable:$true] %s21
      %s23 = sshll.u32 [#allocation2], 4
      %s24 = int_to_ptr.vmem [resolvable:$true] %s23
      %29 = dma.hbm_to_vmem [thread:$0]  %s22, 512, %s24, [#allocation3], 128, 128, 8
    $region13: #{tpu_custom_call.1} parent=1 // pred_fallthru
      _
    // Predicated region
    $region14: #{tpu_custom_call.1} parent=1 // pred_check
      _
    $region15: #{tpu_custom_call.1} parent=1 // pred_check_branch
      %31 = sbr.rel (0) target = $region17
    $region16: #{tpu_custom_call.1} parent=1 // pred_region
      %33 = vsyncadd [#allocation6], 0
      %s34 = sshll.u32 %s3, 4
      %s35 = int_to_ptr.hbm [resolvable:$true] %s34
      %s36 = sshll.u32 [#allocation5], 4
      %s37 = int_to_ptr.vmem [resolvable:$true] %s36
      %42 = dma.hbm_to_vmem [thread:$0]  %s35, 512, %s37, [#allocation6], 128, 128, 8
    $region17: #{tpu_custom_call.1} parent=1 // pred_fallthru
      _
    // Predicated region
    $region18: #{tpu_custom_call.1} parent=1 // pred_check
      _
    $region19: #{tpu_custom_call.1} parent=1 // pred_check_branch
      %44 = sbr.rel (0) target = $region21
    $region20: #{tpu_custom_call.1} parent=1 // pred_region
      _
    $region21: #{tpu_custom_call.1} parent=1 // pred_fallthru
      _
    // Predicated region
    $region22: #{tpu_custom_call.1} parent=1 // pred_check
      _
    $region23: #{tpu_custom_call.1} parent=1 // pred_check_branch
      %46 = sbr.rel (0) target = $region25
    $region24: #{tpu_custom_call.1} parent=1 // pred_region
      %48 = dma.done [#allocation3], 512
    $region25: #{tpu_custom_call.1} parent=1 // pred_fallthru
      _
    // Predicated region
    $region26: #{tpu_custom_call.1} parent=1 // pred_check
      _
    $region27: #{tpu_custom_call.1} parent=1 // pred_check_branch
      %50 = sbr.rel (0) target = $region29
    $region28: #{tpu_custom_call.1} parent=1 // pred_region
      %52 = dma.done [#allocation6], 512
    $region29: #{tpu_custom_call.1} parent=1 // pred_fallthru
      _
    %v53 = vld [vmem:[%s1] sm:$0xf]
    %v54 = vld [vmem:[#allocation2] sm:$0xff]
    %v55 = vld [vmem:[#allocation2 + $0x8] sm:$0xff]
    %v56 = vld [vmem:[#allocation2 + $0x10] sm:$0xff]
    %v57 = vld [vmem:[#allocation2 + $0x18] sm:$0xff]
    %v58 = vld [vmem:[#allocation5] sm:$0xff]
    %v59 = vld [vmem:[#allocation5 + $0x8] sm:$0xff]
    %v60 = vld [vmem:[#allocation5 + $0x10] sm:$0xff]
    %v61 = vld [vmem:[#allocation5 + $0x18] sm:$0xff]
    %v62 = vld [vmem:[%s4] sm:$0xff]
    %v63 = vld [vmem:[%s0] sm:$0xff]
    %v64 = vld [vmem:[%s0 + $0x8] sm:$0xff]
    %v65 = vperm.slane %v62, 0
    %vm66 = vcmask 31744
    %v68 = vsel %vm66, %v63, 0
    %v71 = vsel %vm66, %v64, 0
    %vm73 = vcmask 1043456
    %v75 = vsel %vm73, %v53, 0
    %77 = vmatpush.msra.mxu0 0.0
    %78 = vmatpush.msra.mxu0 0.0
    %79 = vmatpush.msra.mxu0 0.0
    %80 = vmatpush.msra.mxu0 0.0
    %81 = vmatpush.msra.mxu0 0.0
    %82 = vmatpush.msra.mxu0 0.0
    %83 = vmatpush.msra.mxu0 0.0
    %84 = vmatpush.msra.mxu0 0.0
    %85 = vmatpush.msra.mxu0 0.0
    %86 = vmatpush.msra.mxu0 0.0
    %87 = vmatpush.msra.mxu0 0.0
    %88 = vmatpush.msra.mxu0 0.0
    %89 = vmatpush.msra.mxu0 0.0
    %90 = vmatpush.msra.mxu0 0.0
    %91 = vmatpush.msra.mxu0 0.0
    %92 = vmatpush.msra.mxu0 %v75
    %93 = vmatmul.f32.gmra.mxu0 %v68
    %v94 = vpop.f32.mrf.mxu0
    %v95 = vadd.f32 %v65, %v94
    %96 = vmatmul.f32.gmra.mxu0 %v71
    %v97 = vpop.f32.mrf.mxu0
    %v98 = vadd.f32 %v65, %v97
    %99 = vdwg.mxu0
    %vm100 = vcmask 261120
    %v102 = vsel %vm100, 0.0, 0
    %104 = vmatpush.msra.mxu0 0.0
    %105 = vmatpush.msra.mxu0 0.0
    %106 = vmatpush.msra.mxu0 0.0
    %107 = vmatpush.msra.mxu0 0.0
    %108 = vmatpush.msra.mxu0 0.0
    %109 = vmatpush.msra.mxu0 0.0
    %110 = vmatpush.msra.mxu0 0.0
    %111 = vmatpush.msra.mxu0 0.0
    %112 = vmatpush.msra.mxu0 0.0
    %113 = vmatpush.msra.mxu0 0.0
    %114 = vmatpush.msra.mxu0 0.0
    %115 = vmatpush.msra.mxu0 0.0
    %116 = vmatpush.msra.mxu0 %v57
    %117 = vmatpush.msra.mxu0 %v56
    %118 = vmatpush.msra.mxu0 %v55
    %119 = vmatpush.msra.mxu0 %v54
    %120 = vmatmul.f32.gmra.mxu0 %v102
    %v121 = vpop.f32.mrf.mxu0
    %v122 = vadd.f32 %v95, %v121
    %123 = vdwg.mxu0
    %v124 = vxor.u32 %v122, 2147483648
    %v125 = vmul.f32 %v124, 1.442695
    %v126 = vpow.pop %v125
    %v127 = vadd.f32 %v126, 1.0
    %v128 = vrcp.pop %v127
    %v129 = vmul.f32 %v127, %v128
    %v130 = vsub.f32 1.0, %v129
    %v131 = vmul.f32 %v128, %v130
    %v132 = vadd.f32 %v128, %v131
    %vm133 = vweird.f32 %v127
    %vm134 = vweird.f32 %v128
    %vm135 = vmor %vm133, %vm134
    %v136 = vsel %vm135, %v128, %v132
    %v137 = vand.u32 2147483647, %v127
    %vm138 = vcmp.eq.f32.partialorder %v137, 8.507059e+37
    %v139 = vand.u32 %v127, 2147483648
    %v140 = vor.u32 1.1754944e-38, %v139
    %v141 = vsel %vm138, %v140, %v136
    %v142 = vmul.f32 1.0, %v141
    %v143 = vtanh.pop %v122
    %v144 = vmul.f32 %v142, 0.0
    %146 = vrot.lane.b32.xlu0 %v143, 64
    %v147 = vpop.permute.xlu0 %146
    %v149 = vmul.f32 %v142, %v147
    %151 = vrot.lane.b32.xlu0 %v149, 32
    %v152 = vpop.permute.xlu0 %151
    %v154 = vadd.f32 %v144, %v152
    %v155 = vtanh.pop %v154
    %157 = vrot.lane.b32.xlu0 %v155, 64
    %v158 = vpop.permute.xlu0 %157
    %v160 = vmul.f32 %v142, %v158
    %v161 = vperm.slane %v62, 3
    %163 = vrot.lane.b32.xlu0 %v161, 96
    %v164 = vpop.permute.xlu0 %163
    %v166 = vmul.f32 %v160, %v164
    %168 = vrot.lane.b32.xlu0 %v166, 32
    %v169 = vpop.permute.xlu0 %168
    %vm171 = vcmask 254976
    %v172 = vsel %vm171, %v169, 0.0
    %173 = vadd.xlane.f32.xlu0 %v172
    %v174 = vpop.xlane.xlu0 %173
    %176 = vrot.lane.b32.xlu0 %v160, 32
    %v177 = vpop.permute.xlu0 %176
    %v179 = vrot.slane %v95, 2
    %v181 = vsel %vm100, %v177, 0
    %183 = vmatpush.msra.mxu0 0.0
    %184 = vmatpush.msra.mxu0 0.0
    %185 = vmatpush.msra.mxu0 0.0
    %186 = vmatpush.msra.mxu0 0.0
    %187 = vmatpush.msra.mxu0 0.0
    %188 = vmatpush.msra.mxu0 0.0
    %189 = vmatpush.msra.mxu0 0.0
    %190 = vmatpush.msra.mxu0 0.0
    %191 = vmatpush.msra.mxu0 0.0
    %192 = vmatpush.msra.mxu0 0.0
    %193 = vmatpush.msra.mxu0 0.0
    %194 = vmatpush.msra.mxu0 0.0
    %195 = vmatpush.msra.mxu0 %v57
    %196 = vmatpush.msra.mxu0 %v56
    %197 = vmatpush.msra.mxu0 %v55
    %198 = vmatpush.msra.mxu0 %v54
    %199 = vmatmul.f32.gmra.mxu0 %v181
    %v200 = vpop.f32.mrf.mxu0
    %v201 = vadd.f32 %v179, %v200
    %202 = vdwg.mxu0
    %v203 = vxor.u32 %v201, 2147483648
    %v204 = vmul.f32 %v203, 1.442695
    %v205 = vpow.pop %v204
    %v206 = vadd.f32 %v205, 1.0
    %v207 = vrcp.pop %v206
    %v208 = vmul.f32 %v206, %v207
    %v209 = vsub.f32 1.0, %v208
    %v210 = vmul.f32 %v207, %v209
    %v211 = vadd.f32 %v207, %v210
    %vm212 = vweird.f32 %v206
    %vm213 = vweird.f32 %v207
    %vm214 = vmor %vm212, %vm213
    %v215 = vsel %vm214, %v207, %v211
    %v216 = vand.u32 2147483647, %v206
    %vm217 = vcmp.eq.f32.partialorder %v216, 8.507059e+37
    %v218 = vand.u32 %v206, 2147483648
    %v219 = vor.u32 1.1754944e-38, %v218
    %v220 = vsel %vm217, %v219, %v215
    %v221 = vmul.f32 1.0, %v220
    %v222 = vtanh.pop %v201
    %v223 = vmul.f32 %v221, %v154
    %225 = vrot.lane.b32.xlu0 %v222, 64
    %v226 = vpop.permute.xlu0 %225
    %v228 = vmul.f32 %v221, %v226
    %230 = vrot.lane.b32.xlu0 %v228, 32
    %v231 = vpop.permute.xlu0 %230
    %v233 = vadd.f32 %v223, %v231
    %v234 = vtanh.pop %v233
    %236 = vrot.lane.b32.xlu0 %v234, 64
    %v237 = vpop.permute.xlu0 %236
    %v239 = vmul.f32 %v221, %v237
    %v240 = vmul.f32 %v239, %v164
    %242 = vrot.lane.b32.xlu0 %v240, 32
    %v243 = vpop.permute.xlu0 %242
    %v245 = vsel %vm171, %v243, 0.0
    %246 = vadd.xlane.f32.xlu0 %v245
    %v247 = vpop.xlane.xlu0 %246
    %249 = vrot.lane.b32.xlu0 %v239, 32
    %v250 = vpop.permute.xlu0 %249
    %v251 = vrot.slane %v95, 4
    %v253 = vsel %vm100, %v250, 0
    %255 = vmatpush.msra.mxu0 0.0
    %256 = vmatpush.msra.mxu0 0.0
    %257 = vmatpush.msra.mxu0 0.0
    %258 = vmatpush.msra.mxu0 0.0
    %259 = vmatpush.msra.mxu0 0.0
    %260 = vmatpush.msra.mxu0 0.0
    %261 = vmatpush.msra.mxu0 0.0
    %262 = vmatpush.msra.mxu0 0.0
    %263 = vmatpush.msra.mxu0 0.0
    %264 = vmatpush.msra.mxu0 0.0
    %265 = vmatpush.msra.mxu0 0.0
    %266 = vmatpush.msra.mxu0 0.0
    %267 = vmatpush.msra.mxu0 %v57
    %268 = vmatpush.msra.mxu0 %v56
    %269 = vmatpush.msra.mxu0 %v55
    %270 = vmatpush.msra.mxu0 %v54
    %271 = vmatmul.f32.gmra.mxu0 %v253
    %v272 = vpop.f32.mrf.mxu0
    %v273 = vadd.f32 %v251, %v272
    %274 = vdwg.mxu0
    %v275 = vxor.u32 %v273, 2147483648
    %v276 = vmul.f32 %v275, 1.442695
    %v277 = vpow.pop %v276
    %v278 = vadd.f32 %v277, 1.0
    %v279 = vrcp.pop %v278
    %v280 = vmul.f32 %v278, %v279
    %v281 = vsub.f32 1.0, %v280
    %v282 = vmul.f32 %v279, %v281
    %v283 = vadd.f32 %v279, %v282
    %vm284 = vweird.f32 %v278
    %vm285 = vweird.f32 %v279
    %vm286 = vmor %vm284, %vm285
    %v287 = vsel %vm286, %v279, %v283
    %v288 = vand.u32 2147483647, %v278
    %vm289 = vcmp.eq.f32.partialorder %v288, 8.507059e+37
    %v290 = vand.u32 %v278, 2147483648
    %v291 = vor.u32 1.1754944e-38, %v290
    %v292 = vsel %vm289, %v291, %v287
    %v293 = vmul.f32 1.0, %v292
    %v294 = vtanh.pop %v273
    %v295 = vmul.f32 %v293, %v233
    %297 = vrot.lane.b32.xlu0 %v294, 64
    %v298 = vpop.permute.xlu0 %297
    %v300 = vmul.f32 %v293, %v298
    %302 = vrot.lane.b32.xlu0 %v300, 32
    %v303 = vpop.permute.xlu0 %302
    %v305 = vadd.f32 %v295, %v303
    %v306 = vtanh.pop %v305
    %308 = vrot.lane.b32.xlu0 %v306, 64
    %v309 = vpop.permute.xlu0 %308
    %v311 = vmul.f32 %v293, %v309
    %v312 = vmul.f32 %v311, %v164
    %314 = vrot.lane.b32.xlu0 %v312, 32
    %v315 = vpop.permute.xlu0 %314
    %v317 = vsel %vm171, %v315, 0.0
    %318 = vadd.xlane.f32.xlu0 %v317
    %v319 = vpop.xlane.xlu0 %318
    %321 = vrot.lane.b32.xlu0 %v311, 32
    %v322 = vpop.permute.xlu0 %321
    %v323 = vrot.slane %v95, 6
    %v325 = vsel %vm100, %v322, 0
    %327 = vmatpush.msra.mxu0 0.0
    %328 = vmatpush.msra.mxu0 0.0
    %329 = vmatpush.msra.mxu0 0.0
    %330 = vmatpush.msra.mxu0 0.0
    %331 = vmatpush.msra.mxu0 0.0
    %332 = vmatpush.msra.mxu0 0.0
    %333 = vmatpush.msra.mxu0 0.0
    %334 = vmatpush.msra.mxu0 0.0
    %335 = vmatpush.msra.mxu0 0.0
    %336 = vmatpush.msra.mxu0 0.0
    %337 = vmatpush.msra.mxu0 0.0
    %338 = vmatpush.msra.mxu0 0.0
    %339 = vmatpush.msra.mxu0 %v57
    %340 = vmatpush.msra.mxu0 %v56
    %341 = vmatpush.msra.mxu0 %v55
    %342 = vmatpush.msra.mxu0 %v54
    %343 = vmatmul.f32.gmra.mxu0 %v325
    %v344 = vpop.f32.mrf.mxu0
    %v345 = vadd.f32 %v323, %v344
    %346 = vdwg.mxu0
    %v347 = vxor.u32 %v345, 2147483648
    %v348 = vmul.f32 %v347, 1.442695
    %v349 = vpow.pop %v348
    %v350 = vadd.f32 %v349, 1.0
    %v351 = vrcp.pop %v350
    %v352 = vmul.f32 %v350, %v351
    %v353 = vsub.f32 1.0, %v352
    %v354 = vmul.f32 %v351, %v353
    %v355 = vadd.f32 %v351, %v354
    %vm356 = vweird.f32 %v350
    %vm357 = vweird.f32 %v351
    %vm358 = vmor %vm356, %vm357
    %v359 = vsel %vm358, %v351, %v355
    %v360 = vand.u32 2147483647, %v350
    %vm361 = vcmp.eq.f32.partialorder %v360, 8.507059e+37
    %v362 = vand.u32 %v350, 2147483648
    %v363 = vor.u32 1.1754944e-38, %v362
    %v364 = vsel %vm361, %v363, %v359
    %v365 = vmul.f32 1.0, %v364
    %v366 = vtanh.pop %v345
    %v367 = vmul.f32 %v365, %v305
    %369 = vrot.lane.b32.xlu0 %v366, 64
    %v370 = vpop.permute.xlu0 %369
    %v372 = vmul.f32 %v365, %v370
    %374 = vrot.lane.b32.xlu0 %v372, 32
    %v375 = vpop.permute.xlu0 %374
    %v377 = vadd.f32 %v367, %v375
    %v378 = vtanh.pop %v377
    %380 = vrot.lane.b32.xlu0 %v378, 64
    %v381 = vpop.permute.xlu0 %380
    %v383 = vmul.f32 %v365, %v381
    %v384 = vmul.f32 %v383, %v164
    %386 = vrot.lane.b32.xlu0 %v384, 32
    %v387 = vpop.permute.xlu0 %386
    %v389 = vsel %vm171, %v387, 0.0
    %390 = vadd.xlane.f32.xlu0 %v389
    %v391 = vpop.xlane.xlu0 %390
    %393 = vrot.lane.b32.xlu0 %v383, 32
    %v394 = vpop.permute.xlu0 %393
    %v395 = vsel %vm100, %v394, 0
    %397 = vmatpush.msra.mxu0 0.0
    %398 = vmatpush.msra.mxu0 0.0
    %399 = vmatpush.msra.mxu0 0.0
    %400 = vmatpush.msra.mxu0 0.0
    %401 = vmatpush.msra.mxu0 0.0
    %402 = vmatpush.msra.mxu0 0.0
    %403 = vmatpush.msra.mxu0 0.0
    %404 = vmatpush.msra.mxu0 0.0
    %405 = vmatpush.msra.mxu0 0.0
    %406 = vmatpush.msra.mxu0 0.0
    %407 = vmatpush.msra.mxu0 0.0
    %408 = vmatpush.msra.mxu0 0.0
    %409 = vmatpush.msra.mxu0 %v57
    %410 = vmatpush.msra.mxu0 %v56
    %411 = vmatpush.msra.mxu0 %v55
    %412 = vmatpush.msra.mxu0 %v54
    %413 = vmatmul.f32.gmra.mxu0 %v395
    %v414 = vpop.f32.mrf.mxu0
    %v415 = vadd.f32 %v98, %v414
    %416 = vdwg.mxu0
    %v417 = vxor.u32 %v415, 2147483648
    %v418 = vmul.f32 %v417, 1.442695
    %v419 = vpow.pop %v418
    %v420 = vadd.f32 %v419, 1.0
    %v421 = vrcp.pop %v420
    %v422 = vmul.f32 %v420, %v421
    %v423 = vsub.f32 1.0, %v422
    %v424 = vmul.f32 %v421, %v423
    %v425 = vadd.f32 %v421, %v424
    %vm426 = vweird.f32 %v420
    %vm427 = vweird.f32 %v421
    %vm428 = vmor %vm426, %vm427
    %v429 = vsel %vm428, %v421, %v425
    %v430 = vand.u32 2147483647, %v420
    %vm431 = vcmp.eq.f32.partialorder %v430, 8.507059e+37
    %v432 = vand.u32 %v420, 2147483648
    %v433 = vor.u32 1.1754944e-38, %v432
    %v434 = vsel %vm431, %v433, %v429
    %v435 = vmul.f32 1.0, %v434
    %v436 = vtanh.pop %v415
    %v437 = vmul.f32 %v435, %v377
    %439 = vrot.lane.b32.xlu0 %v436, 64
    %v440 = vpop.permute.xlu0 %439
    %v442 = vmul.f32 %v435, %v440
    %444 = vrot.lane.b32.xlu0 %v442, 32
    %v445 = vpop.permute.xlu0 %444
    %v447 = vadd.f32 %v437, %v445
    %v448 = vtanh.pop %v447
    %450 = vrot.lane.b32.xlu0 %v448, 64
    %v451 = vpop.permute.xlu0 %450
    %v453 = vmul.f32 %v435, %v451
    %v454 = vmul.f32 %v453, %v164
    %456 = vrot.lane.b32.xlu0 %v454, 32
    %v457 = vpop.permute.xlu0 %456
    %v459 = vsel %vm171, %v457, 0.0
    %460 = vadd.xlane.f32.xlu0 %v459
    %v461 = vpop.xlane.xlu0 %460
    %463 = vrot.lane.b32.xlu0 %v453, 32
    %v464 = vpop.permute.xlu0 %463
    %v466 = vrot.slane %v98, 2
    %v468 = vsel %vm100, %v464, 0
    %470 = vmatpush.msra.mxu0 0.0
    %471 = vmatpush.msra.mxu0 0.0
    %472 = vmatpush.msra.mxu0 0.0
    %473 = vmatpush.msra.mxu0 0.0
    %474 = vmatpush.msra.mxu0 0.0
    %475 = vmatpush.msra.mxu0 0.0
    %476 = vmatpush.msra.mxu0 0.0
    %477 = vmatpush.msra.mxu0 0.0
    %478 = vmatpush.msra.mxu0 0.0
    %479 = vmatpush.msra.mxu0 0.0
    %480 = vmatpush.msra.mxu0 0.0
    %481 = vmatpush.msra.mxu0 0.0
    %482 = vmatpush.msra.mxu0 %v57
    %483 = vmatpush.msra.mxu0 %v56
    %484 = vmatpush.msra.mxu0 %v55
    %485 = vmatpush.msra.mxu0 %v54
    %486 = vmatmul.f32.gmra.mxu0 %v468
    %v487 = vpop.f32.mrf.mxu0
    %v488 = vadd.f32 %v466, %v487
    %489 = vdwg.mxu0
    %v490 = vxor.u32 %v488, 2147483648
    %v491 = vmul.f32 %v490, 1.442695
    %v492 = vpow.pop %v491
    %v493 = vadd.f32 %v492, 1.0
    %v494 = vrcp.pop %v493
    %v495 = vmul.f32 %v493, %v494
    %v496 = vsub.f32 1.0, %v495
    %v497 = vmul.f32 %v494, %v496
    %v498 = vadd.f32 %v494, %v497
    %vm499 = vweird.f32 %v493
    %vm500 = vweird.f32 %v494
    %vm501 = vmor %vm499, %vm500
    %v502 = vsel %vm501, %v494, %v498
    %v503 = vand.u32 2147483647, %v493
    %vm504 = vcmp.eq.f32.partialorder %v503, 8.507059e+37
    %v505 = vand.u32 %v493, 2147483648
    %v506 = vor.u32 1.1754944e-38, %v505
    %v507 = vsel %vm504, %v506, %v502
    %v508 = vmul.f32 1.0, %v507
    %v509 = vtanh.pop %v488
    %v510 = vmul.f32 %v508, %v447
    %512 = vrot.lane.b32.xlu0 %v509, 64
    %v513 = vpop.permute.xlu0 %512
    %v515 = vmul.f32 %v508, %v513
    %517 = vrot.lane.b32.xlu0 %v515, 32
    %v518 = vpop.permute.xlu0 %517
    %v520 = vadd.f32 %v510, %v518
    %v521 = vtanh.pop %v520
    %523 = vrot.lane.b32.xlu0 %v521, 64
    %v524 = vpop.permute.xlu0 %523
    %v526 = vmul.f32 %v508, %v524
    %v527 = vmul.f32 %v526, %v164
    %529 = vrot.lane.b32.xlu0 %v527, 32
    %v530 = vpop.permute.xlu0 %529
    %v532 = vsel %vm171, %v530, 0.0
    %533 = vadd.xlane.f32.xlu0 %v532
    %v534 = vpop.xlane.xlu0 %533
    %536 = vrot.lane.b32.xlu0 %v526, 32
    %v537 = vpop.permute.xlu0 %536
    %v538 = vrot.slane %v98, 4
    %v540 = vsel %vm100, %v537, 0
    %542 = vmatpush.msra.mxu0 0.0
    %543 = vmatpush.msra.mxu0 0.0
    %544 = vmatpush.msra.mxu0 0.0
    %545 = vmatpush.msra.mxu0 0.0
    %546 = vmatpush.msra.mxu0 0.0
    %547 = vmatpush.msra.mxu0 0.0
    %548 = vmatpush.msra.mxu0 0.0
    %549 = vmatpush.msra.mxu0 0.0
    %550 = vmatpush.msra.mxu0 0.0
    %551 = vmatpush.msra.mxu0 0.0
    %552 = vmatpush.msra.mxu0 0.0
    %553 = vmatpush.msra.mxu0 0.0
    %554 = vmatpush.msra.mxu0 %v57
    %555 = vmatpush.msra.mxu0 %v56
    %556 = vmatpush.msra.mxu0 %v55
    %557 = vmatpush.msra.mxu0 %v54
    %558 = vmatmul.f32.gmra.mxu0 %v540
    %v559 = vpop.f32.mrf.mxu0
    %v560 = vadd.f32 %v538, %v559
    %561 = vdwg.mxu0
    %v562 = vxor.u32 %v560, 2147483648
    %v563 = vmul.f32 %v562, 1.442695
    %v564 = vpow.pop %v563
    %v565 = vadd.f32 %v564, 1.0
    %v566 = vrcp.pop %v565
    %v567 = vmul.f32 %v565, %v566
    %v568 = vsub.f32 1.0, %v567
    %v569 = vmul.f32 %v566, %v568
    %v570 = vadd.f32 %v566, %v569
    %vm571 = vweird.f32 %v565
    %vm572 = vweird.f32 %v566
    %vm573 = vmor %vm571, %vm572
    %v574 = vsel %vm573, %v566, %v570
    %v575 = vand.u32 2147483647, %v565
    %vm576 = vcmp.eq.f32.partialorder %v575, 8.507059e+37
    %v577 = vand.u32 %v565, 2147483648
    %v578 = vor.u32 1.1754944e-38, %v577
    %v579 = vsel %vm576, %v578, %v574
    %v580 = vmul.f32 1.0, %v579
    %v581 = vtanh.pop %v560
    %v582 = vmul.f32 %v580, %v520
    %584 = vrot.lane.b32.xlu0 %v581, 64
    %v585 = vpop.permute.xlu0 %584
    %v587 = vmul.f32 %v580, %v585
    %589 = vrot.lane.b32.xlu0 %v587, 32
    %v590 = vpop.permute.xlu0 %589
    %v592 = vadd.f32 %v582, %v590
    %v593 = vtanh.pop %v592
    %595 = vrot.lane.b32.xlu0 %v593, 64
    %v596 = vpop.permute.xlu0 %595
    %v598 = vmul.f32 %v580, %v596
    %v599 = vmul.f32 %v598, %v164
    %601 = vrot.lane.b32.xlu0 %v599, 32
    %v602 = vpop.permute.xlu0 %601
    %v604 = vsel %vm171, %v602, 0.0
    %605 = vadd.xlane.f32.xlu0 %v604
    %v606 = vpop.xlane.xlu0 %605
    %608 = vrot.lane.b32.xlu0 %v598, 32
    %v609 = vpop.permute.xlu0 %608
    %v610 = vrot.slane %v98, 6
    %v612 = vsel %vm100, %v609, 0
    %614 = vmatpush.msra.mxu0 0.0
    %615 = vmatpush.msra.mxu0 0.0
    %616 = vmatpush.msra.mxu0 0.0
    %617 = vmatpush.msra.mxu0 0.0
    %618 = vmatpush.msra.mxu0 0.0
    %619 = vmatpush.msra.mxu0 0.0
    %620 = vmatpush.msra.mxu0 0.0
    %621 = vmatpush.msra.mxu0 0.0
    %622 = vmatpush.msra.mxu0 0.0
    %623 = vmatpush.msra.mxu0 0.0
    %624 = vmatpush.msra.mxu0 0.0
    %625 = vmatpush.msra.mxu0 0.0
    %626 = vmatpush.msra.mxu0 %v57
    %627 = vmatpush.msra.mxu0 %v56
    %628 = vmatpush.msra.mxu0 %v55
    %629 = vmatpush.msra.mxu0 %v54
    %630 = vmatmul.f32.gmra.mxu0 %v612
    %v631 = vpop.f32.mrf.mxu0
    %v632 = vadd.f32 %v610, %v631
    %633 = vdwg.mxu0
    %v634 = vxor.u32 %v632, 2147483648
    %v635 = vmul.f32 %v634, 1.442695
    %v636 = vpow.pop %v635
    %v637 = vadd.f32 %v636, 1.0
    %v638 = vrcp.pop %v637
    %v639 = vmul.f32 %v637, %v638
    %v640 = vsub.f32 1.0, %v639
    %v641 = vmul.f32 %v638, %v640
    %v642 = vadd.f32 %v638, %v641
    %vm643 = vweird.f32 %v637
    %vm644 = vweird.f32 %v638
    %vm645 = vmor %vm643, %vm644
    %v646 = vsel %vm645, %v638, %v642
    %v647 = vand.u32 2147483647, %v637
    %vm648 = vcmp.eq.f32.partialorder %v647, 8.507059e+37
    %v649 = vand.u32 %v637, 2147483648
    %v650 = vor.u32 1.1754944e-38, %v649
    %v651 = vsel %vm648, %v650, %v646
    %v652 = vmul.f32 1.0, %v651
    %v653 = vtanh.pop %v632
    %v654 = vmul.f32 %v652, %v592
    %656 = vrot.lane.b32.xlu0 %v653, 64
    %v657 = vpop.permute.xlu0 %656
    %v659 = vmul.f32 %v652, %v657
    %661 = vrot.lane.b32.xlu0 %v659, 32
    %v662 = vpop.permute.xlu0 %661
    %v664 = vadd.f32 %v654, %v662
    %v665 = vtanh.pop %v664
    %667 = vrot.lane.b32.xlu0 %v665, 64
    %v668 = vpop.permute.xlu0 %667
    %v670 = vmul.f32 %v652, %v668
    %v671 = vmul.f32 %v670, %v164
    %673 = vrot.lane.b32.xlu0 %v671, 32
    %v674 = vpop.permute.xlu0 %673
    %v676 = vsel %vm171, %v674, 0.0
    %677 = vadd.xlane.f32.xlu0 %v676
    %v678 = vpop.xlane.xlu0 %677
    %v679 = vmax.f32 %v174, %v247
    %v680 = vmax.f32 %v679, %v319
    %v681 = vmax.f32 %v680, %v391
    %v682 = vmax.f32 %v681, %v461
    %v683 = vmax.f32 %v682, %v534
    %v684 = vmax.f32 %v683, %v606
    %v685 = vmax.f32 %v684, %v678
    %v686 = vsub.f32 %v174, %v685
    %v687 = vmul.f32 %v686, 1.442695
    %v688 = vpow.pop %v687
    %v689 = vadd.f32 %v688, 0.0
    %v690 = vmul.f32 %v688, %v160
    %v691 = vadd.f32 %v690, 0.0
    %v692 = vsub.f32 %v247, %v685
    %v693 = vmul.f32 %v692, 1.442695
    %v694 = vpow.pop %v693
    %v695 = vadd.f32 %v689, %v694
    %v696 = vmul.f32 %v694, %v239
    %v697 = vadd.f32 %v691, %v696
    %v698 = vsub.f32 %v319, %v685
    %v699 = vmul.f32 %v698, 1.442695
    %v700 = vpow.pop %v699
    %v701 = vadd.f32 %v695, %v700
    %v702 = vmul.f32 %v700, %v311
    %v703 = vadd.f32 %v697, %v702
    %v704 = vsub.f32 %v391, %v685
    %v705 = vmul.f32 %v704, 1.442695
    %v706 = vpow.pop %v705
    %v707 = vadd.f32 %v701, %v706
    %v708 = vmul.f32 %v706, %v383
    %v709 = vadd.f32 %v703, %v708
    %v710 = vsub.f32 %v461, %v685
    %v711 = vmul.f32 %v710, 1.442695
    %v712 = vpow.pop %v711
    %v713 = vadd.f32 %v707, %v712
    %v714 = vmul.f32 %v712, %v453
    %v715 = vadd.f32 %v709, %v714
    %v716 = vsub.f32 %v534, %v685
    %v717 = vmul.f32 %v716, 1.442695
    %v718 = vpow.pop %v717
    %v719 = vadd.f32 %v713, %v718
    %v720 = vmul.f32 %v718, %v526
    %v721 = vadd.f32 %v715, %v720
    %v722 = vsub.f32 %v606, %v685
    %v723 = vmul.f32 %v722, 1.442695
    %v724 = vpow.pop %v723
    %v725 = vadd.f32 %v719, %v724
    %v726 = vmul.f32 %v724, %v598
    %v727 = vadd.f32 %v721, %v726
    %v728 = vsub.f32 %v678, %v685
    %v729 = vmul.f32 %v728, 1.442695
    %v730 = vpow.pop %v729
    %v731 = vadd.f32 %v725, %v730
    %v732 = vmul.f32 %v730, %v670
    %v733 = vadd.f32 %v727, %v732
    %v734 = vrcp.pop %v731
    %v735 = vmul.f32 %v731, %v734
    %v736 = vsub.f32 1.0, %v735
    %v737 = vmul.f32 %v734, %v736
    %v738 = vadd.f32 %v734, %v737
    %vm739 = vweird.f32 %v731
    %vm740 = vweird.f32 %v734
    %vm741 = vmor %vm739, %vm740
    %v742 = vsel %vm741, %v734, %v738
    %v743 = vand.u32 2147483647, %v731
    %vm744 = vcmp.eq.f32.partialorder %v743, 8.507059e+37
    %v745 = vand.u32 %v731, 2147483648
    %v746 = vor.u32 1.1754944e-38, %v745
    %v747 = vsel %vm744, %v746, %v742
    %v748 = vmul.f32 %v733, %v747
    %v749 = vperm.slane %v62, 5
    %751 = vrot.lane.b32.xlu0 %v749, 96
    %v752 = vpop.permute.xlu0 %751
    %v754 = vmul.f32 %v748, %v752
    %756 = vrot.lane.b32.xlu0 %v754, 32
    %v757 = vpop.permute.xlu0 %756
    %v759 = vsel %vm171, %v757, 0.0
    %760 = vadd.xlane.f32.xlu0 %v759
    %v761 = vpop.xlane.xlu0 %760
    %v762 = vperm.slane %v62, 6
    %v763 = vadd.f32 %v761, %v762
    %764 = vset.pattern.permute.xlu0 0
    %765 = vperm.xlu0 %764, %v64
    %v766 = vpop.permute.xlu0 %765
    %v768 = vperm.slane %v62, 1
    %v769 = vmul.f32 %v766, %v768
    %771 = vrot.lane.b32.xlu0 %v670, 32
    %v772 = vpop.permute.xlu0 %771
    %v773 = vsel %vm100, %v772, 0
    %775 = vmatpush.msra.mxu0 0.0
    %776 = vmatpush.msra.mxu0 0.0
    %777 = vmatpush.msra.mxu0 0.0
    %778 = vmatpush.msra.mxu0 0.0
    %779 = vmatpush.msra.mxu0 0.0
    %780 = vmatpush.msra.mxu0 0.0
    %781 = vmatpush.msra.mxu0 0.0
    %782 = vmatpush.msra.mxu0 0.0
    %783 = vmatpush.msra.mxu0 0.0
    %784 = vmatpush.msra.mxu0 0.0
    %785 = vmatpush.msra.mxu0 0.0
    %786 = vmatpush.msra.mxu0 0.0
    %787 = vmatpush.msra.mxu0 %v61
    %788 = vmatpush.msra.mxu0 %v60
    %789 = vmatpush.msra.mxu0 %v59
    %790 = vmatpush.msra.mxu0 %v58
    %791 = vmatmul.f32.gmra.mxu0 %v773
    %v792 = vpop.f32.mrf.mxu0
    %v793 = vadd.f32 0.0, %v792
    %794 = vdwg.mxu0
    %v796 = vrot.slane %v793, 2
    %v798 = vadd.f32 %v769, %v796
    %v799 = vperm.slane %v62, 2
    %v800 = vadd.f32 %v798, %v799
    %v801 = vxor.u32 %v800, 2147483648
    %v802 = vmul.f32 %v801, 1.442695
    %v803 = vpow.pop %v802
    %v804 = vadd.f32 %v803, 1.0
    %v805 = vrcp.pop %v804
    %v806 = vmul.f32 %v804, %v805
    %v807 = vsub.f32 1.0, %v806
    %v808 = vmul.f32 %v805, %v807
    %v809 = vadd.f32 %v805, %v808
    %vm810 = vweird.f32 %v804
    %vm811 = vweird.f32 %v805
    %vm812 = vmor %vm810, %vm811
    %v813 = vsel %vm812, %v805, %v809
    %v814 = vand.u32 2147483647, %v804
    %vm815 = vcmp.eq.f32.partialorder %v814, 8.507059e+37
    %v816 = vand.u32 %v804, 2147483648
    %v817 = vor.u32 1.1754944e-38, %v816
    %v818 = vsel %vm815, %v817, %v813
    %v819 = vmul.f32 1.0, %v818
    %v820 = vtanh.pop %v800
    %v822 = vrot.slane %v664, 2
    %v824 = vmul.f32 %v819, %v822
    %826 = vrot.lane.b32.xlu0 %v820, 64
    %v827 = vpop.permute.xlu0 %826
    %v829 = vmul.f32 %v819, %v827
    %831 = vrot.lane.b32.xlu0 %v829, 32
    %v832 = vpop.permute.xlu0 %831
    %v834 = vadd.f32 %v824, %v832
    %v835 = vtanh.pop %v834
    %837 = vrot.lane.b32.xlu0 %v835, 64
    %v838 = vpop.permute.xlu0 %837
    %v840 = vmul.f32 %v819, %v838
    %v841 = vperm.slane %v62, 4
    %843 = vrot.lane.b32.xlu0 %v841, 96
    %v844 = vpop.permute.xlu0 %843
    %v846 = vmul.f32 %v840, %v844
    %848 = vrot.lane.b32.xlu0 %v846, 32
    %v849 = vpop.permute.xlu0 %848
    %vm851 = vcmask 261126
    %v852 = vsel %vm851, %v849, 0.0
    %853 = vadd.xlane.f32.xlu0 %v852
    %v854 = vpop.xlane.xlu0 %853
    %v856 = vrot.slane %v763, 2
    %v858 = vadd.f32 %v854, %v856
    %860 = vset.pattern.permute.xlu0 0
    %861 = vperm.xlu0 %860, %v858
    %v862 = vpop.permute.xlu0 %861
    %v864 = vmul.f32 %v862, %v768
    %v866 = vrot.slane %v840, 6
    %867 = vrot.lane.b32.xlu0 %v866, 32
    %v868 = vpop.permute.xlu0 %867
    %v869 = vsel %vm100, %v868, 0
    %871 = vmatpush.msra.mxu0 0.0
    %872 = vmatpush.msra.mxu0 0.0
    %873 = vmatpush.msra.mxu0 0.0
    %874 = vmatpush.msra.mxu0 0.0
    %875 = vmatpush.msra.mxu0 0.0
    %876 = vmatpush.msra.mxu0 0.0
    %877 = vmatpush.msra.mxu0 0.0
    %878 = vmatpush.msra.mxu0 0.0
    %879 = vmatpush.msra.mxu0 0.0
    %880 = vmatpush.msra.mxu0 0.0
    %881 = vmatpush.msra.mxu0 0.0
    %882 = vmatpush.msra.mxu0 0.0
    %883 = vmatpush.msra.mxu0 %v61
    %884 = vmatpush.msra.mxu0 %v60
    %885 = vmatpush.msra.mxu0 %v59
    %886 = vmatpush.msra.mxu0 %v58
    %887 = vmatmul.f32.gmra.mxu0 %v869
    %v888 = vpop.f32.mrf.mxu0
    %v889 = vadd.f32 0.0, %v888
    %890 = vdwg.mxu0
    %v892 = vrot.slane %v889, 2
    %v894 = vadd.f32 %v864, %v892
    %v895 = vadd.f32 %v894, %v799
    %v896 = vxor.u32 %v895, 2147483648
    %v897 = vmul.f32 %v896, 1.442695
    %v898 = vpow.pop %v897
    %v899 = vadd.f32 %v898, 1.0
    %v900 = vrcp.pop %v899
    %v901 = vmul.f32 %v899, %v900
    %v902 = vsub.f32 1.0, %v901
    %v903 = vmul.f32 %v900, %v902
    %v904 = vadd.f32 %v900, %v903
    %vm905 = vweird.f32 %v899
    %vm906 = vweird.f32 %v900
    %vm907 = vmor %vm905, %vm906
    %v908 = vsel %vm907, %v900, %v904
    %v909 = vand.u32 2147483647, %v899
    %vm910 = vcmp.eq.f32.partialorder %v909, 8.507059e+37
    %v911 = vand.u32 %v899, 2147483648
    %v912 = vor.u32 1.1754944e-38, %v911
    %v913 = vsel %vm910, %v912, %v908
    %v914 = vmul.f32 1.0, %v913
    %v915 = vtanh.pop %v895
    %v916 = vmul.f32 %v914, %v834
    %918 = vrot.lane.b32.xlu0 %v915, 64
    %v919 = vpop.permute.xlu0 %918
    %v921 = vmul.f32 %v914, %v919
    %923 = vrot.lane.b32.xlu0 %v921, 32
    %v924 = vpop.permute.xlu0 %923
    %v926 = vadd.f32 %v916, %v924
    %v927 = vtanh.pop %v926
    %929 = vrot.lane.b32.xlu0 %v927, 64
    %v930 = vpop.permute.xlu0 %929
    %v932 = vmul.f32 %v914, %v930
    %v933 = vmul.f32 %v932, %v844
    %935 = vrot.lane.b32.xlu0 %v933, 32
    %v936 = vpop.permute.xlu0 %935
    %v938 = vsel %vm851, %v936, 0.0
    %939 = vadd.xlane.f32.xlu0 %v938
    %v940 = vpop.xlane.xlu0 %939
    %v941 = vadd.f32 %v940, %v856
    %943 = vset.pattern.permute.xlu0 0
    %944 = vperm.xlu0 %943, %v941
    %v945 = vpop.permute.xlu0 %944
    %v947 = vmul.f32 %v945, %v768
    %v949 = vrot.slane %v932, 6
    %950 = vrot.lane.b32.xlu0 %v949, 32
    %v951 = vpop.permute.xlu0 %950
    %v952 = vsel %vm100, %v951, 0
    %954 = vmatpush.msra.mxu0 0.0
    %955 = vmatpush.msra.mxu0 0.0
    %956 = vmatpush.msra.mxu0 0.0
    %957 = vmatpush.msra.mxu0 0.0
    %958 = vmatpush.msra.mxu0 0.0
    %959 = vmatpush.msra.mxu0 0.0
    %960 = vmatpush.msra.mxu0 0.0
    %961 = vmatpush.msra.mxu0 0.0
    %962 = vmatpush.msra.mxu0 0.0
    %963 = vmatpush.msra.mxu0 0.0
    %964 = vmatpush.msra.mxu0 0.0
    %965 = vmatpush.msra.mxu0 0.0
    %966 = vmatpush.msra.mxu0 %v61
    %967 = vmatpush.msra.mxu0 %v60
    %968 = vmatpush.msra.mxu0 %v59
    %969 = vmatpush.msra.mxu0 %v58
    %970 = vmatmul.f32.gmra.mxu0 %v952
    %v971 = vpop.f32.mrf.mxu0
    %v972 = vadd.f32 0.0, %v971
    %973 = vdwg.mxu0
    %v975 = vrot.slane %v972, 2
    %v977 = vadd.f32 %v947, %v975
    %v978 = vadd.f32 %v977, %v799
    %v979 = vxor.u32 %v978, 2147483648
    %v980 = vmul.f32 %v979, 1.442695
    %v981 = vpow.pop %v980
    %v982 = vadd.f32 %v981, 1.0
    %v983 = vrcp.pop %v982
    %v984 = vmul.f32 %v982, %v983
    %v985 = vsub.f32 1.0, %v984
    %v986 = vmul.f32 %v983, %v985
    %v987 = vadd.f32 %v983, %v986
    %vm988 = vweird.f32 %v982
    %vm989 = vweird.f32 %v983
    %vm990 = vmor %vm988, %vm989
    %v991 = vsel %vm990, %v983, %v987
    %v992 = vand.u32 2147483647, %v982
    %vm993 = vcmp.eq.f32.partialorder %v992, 8.507059e+37
    %v994 = vand.u32 %v982, 2147483648
    %v995 = vor.u32 1.1754944e-38, %v994
    %v996 = vsel %vm993, %v995, %v991
    %v997 = vmul.f32 1.0, %v996
    %v998 = vtanh.pop %v978
    %v999 = vmul.f32 %v997, %v926
    %1001 = vrot.lane.b32.xlu0 %v998, 64
    %v1002 = vpop.permute.xlu0 %1001
    %v1004 = vmul.f32 %v997, %v1002
    %1006 = vrot.lane.b32.xlu0 %v1004, 32
    %v1007 = vpop.permute.xlu0 %1006
    %v1009 = vadd.f32 %v999, %v1007
    %v1010 = vtanh.pop %v1009
    %1012 = vrot.lane.b32.xlu0 %v1010, 64
    %v1013 = vpop.permute.xlu0 %1012
    %v1015 = vmul.f32 %v997, %v1013
    %v1016 = vmul.f32 %v1015, %v844
    %1018 = vrot.lane.b32.xlu0 %v1016, 32
    %v1019 = vpop.permute.xlu0 %1018
    %v1021 = vsel %vm851, %v1019, 0.0
    %1022 = vadd.xlane.f32.xlu0 %v1021
    %v1023 = vpop.xlane.xlu0 %1022
    %v1024 = vadd.f32 %v1023, %v856
    %1026 = vset.pattern.permute.xlu0 0
    %1027 = vperm.xlu0 %1026, %v1024
    %v1028 = vpop.permute.xlu0 %1027
    %v1030 = vmul.f32 %v1028, %v768
    %v1032 = vrot.slane %v1015, 6
    %1033 = vrot.lane.b32.xlu0 %v1032, 32
    %v1034 = vpop.permute.xlu0 %1033
    %v1035 = vsel %vm100, %v1034, 0
    %1037 = vmatpush.msra.mxu0 0.0
    %1038 = vmatpush.msra.mxu0 0.0
    %1039 = vmatpush.msra.mxu0 0.0
    %1040 = vmatpush.msra.mxu0 0.0
    %1041 = vmatpush.msra.mxu0 0.0
    %1042 = vmatpush.msra.mxu0 0.0
    %1043 = vmatpush.msra.mxu0 0.0
    %1044 = vmatpush.msra.mxu0 0.0
    %1045 = vmatpush.msra.mxu0 0.0
    %1046 = vmatpush.msra.mxu0 0.0
    %1047 = vmatpush.msra.mxu0 0.0
    %1048 = vmatpush.msra.mxu0 0.0
    %1049 = vmatpush.msra.mxu0 %v61
    %1050 = vmatpush.msra.mxu0 %v60
    %1051 = vmatpush.msra.mxu0 %v59
    %1052 = vmatpush.msra.mxu0 %v58
    %1053 = vmatmul.f32.gmra.mxu0 %v1035
    %v1054 = vpop.f32.mrf.mxu0
    %v1055 = vadd.f32 0.0, %v1054
    %1056 = vdwg.mxu0
    %v1058 = vrot.slane %v1055, 2
    %v1060 = vadd.f32 %v1030, %v1058
    %v1061 = vadd.f32 %v1060, %v799
    %v1062 = vxor.u32 %v1061, 2147483648
    %v1063 = vmul.f32 %v1062, 1.442695
    %v1064 = vpow.pop %v1063
    %v1065 = vadd.f32 %v1064, 1.0
    %v1066 = vrcp.pop %v1065
    %v1067 = vmul.f32 %v1065, %v1066
    %v1068 = vsub.f32 1.0, %v1067
    %v1069 = vmul.f32 %v1066, %v1068
    %v1070 = vadd.f32 %v1066, %v1069
    %vm1071 = vweird.f32 %v1065
    %vm1072 = vweird.f32 %v1066
    %vm1073 = vmor %vm1071, %vm1072
    %v1074 = vsel %vm1073, %v1066, %v1070
    %v1075 = vand.u32 2147483647, %v1065
    %vm1076 = vcmp.eq.f32.partialorder %v1075, 8.507059e+37
    %v1077 = vand.u32 %v1065, 2147483648
    %v1078 = vor.u32 1.1754944e-38, %v1077
    %v1079 = vsel %vm1076, %v1078, %v1074
    %v1080 = vmul.f32 1.0, %v1079
    %v1081 = vtanh.pop %v1061
    %v1082 = vmul.f32 %v1080, %v1009
    %1084 = vrot.lane.b32.xlu0 %v1081, 64
    %v1085 = vpop.permute.xlu0 %1084
    %v1087 = vmul.f32 %v1080, %v1085
    %1089 = vrot.lane.b32.xlu0 %v1087, 32
    %v1090 = vpop.permute.xlu0 %1089
    %v1092 = vadd.f32 %v1082, %v1090
    %v1093 = vtanh.pop %v1092
    %1095 = vrot.lane.b32.xlu0 %v1093, 64
    %v1096 = vpop.permute.xlu0 %1095
    %v1098 = vmul.f32 %v1080, %v1096
    %v1099 = vmul.f32 %v1098, %v844
    %1101 = vrot.lane.b32.xlu0 %v1099, 32
    %v1102 = vpop.permute.xlu0 %1101
    %v1104 = vsel %vm851, %v1102, 0.0
    %1105 = vadd.xlane.f32.xlu0 %v1104
    %v1106 = vpop.xlane.xlu0 %1105
    %v1107 = vadd.f32 %v1106, %v856
    %1109 = vset.pattern.permute.xlu0 0
    %1110 = vperm.xlu0 %1109, %v1107
    %v1111 = vpop.permute.xlu0 %1110
    %v1113 = vmul.f32 %v1111, %v768
    %v1115 = vrot.slane %v1098, 6
    %1116 = vrot.lane.b32.xlu0 %v1115, 32
    %v1117 = vpop.permute.xlu0 %1116
    %v1118 = vsel %vm100, %v1117, 0
    %1120 = vmatpush.msra.mxu0 0.0
    %1121 = vmatpush.msra.mxu0 0.0
    %1122 = vmatpush.msra.mxu0 0.0
    %1123 = vmatpush.msra.mxu0 0.0
    %1124 = vmatpush.msra.mxu0 0.0
    %1125 = vmatpush.msra.mxu0 0.0
    %1126 = vmatpush.msra.mxu0 0.0
    %1127 = vmatpush.msra.mxu0 0.0
    %1128 = vmatpush.msra.mxu0 0.0
    %1129 = vmatpush.msra.mxu0 0.0
    %1130 = vmatpush.msra.mxu0 0.0
    %1131 = vmatpush.msra.mxu0 0.0
    %1132 = vmatpush.msra.mxu0 %v61
    %1133 = vmatpush.msra.mxu0 %v60
    %1134 = vmatpush.msra.mxu0 %v59
    %1135 = vmatpush.msra.mxu0 %v58
    %1136 = vmatmul.f32.gmra.mxu0 %v1118
    %v1137 = vpop.f32.mrf.mxu0
    %v1138 = vadd.f32 0.0, %v1137
    %1139 = vdwg.mxu0
    %v1141 = vrot.slane %v1138, 2
    %v1143 = vadd.f32 %v1113, %v1141
    %v1144 = vadd.f32 %v1143, %v799
    %v1145 = vxor.u32 %v1144, 2147483648
    %v1146 = vmul.f32 %v1145, 1.442695
    %v1147 = vpow.pop %v1146
    %v1148 = vadd.f32 %v1147, 1.0
    %v1149 = vrcp.pop %v1148
    %v1150 = vmul.f32 %v1148, %v1149
    %v1151 = vsub.f32 1.0, %v1150
    %v1152 = vmul.f32 %v1149, %v1151
    %v1153 = vadd.f32 %v1149, %v1152
    %vm1154 = vweird.f32 %v1148
    %vm1155 = vweird.f32 %v1149
    %vm1156 = vmor %vm1154, %vm1155
    %v1157 = vsel %vm1156, %v1149, %v1153
    %v1158 = vand.u32 2147483647, %v1148
    %vm1159 = vcmp.eq.f32.partialorder %v1158, 8.507059e+37
    %v1160 = vand.u32 %v1148, 2147483648
    %v1161 = vor.u32 1.1754944e-38, %v1160
    %v1162 = vsel %vm1159, %v1161, %v1157
    %v1163 = vmul.f32 1.0, %v1162
    %v1164 = vtanh.pop %v1144
    %v1165 = vmul.f32 %v1163, %v1092
    %1167 = vrot.lane.b32.xlu0 %v1164, 64
    %v1168 = vpop.permute.xlu0 %1167
    %v1170 = vmul.f32 %v1163, %v1168
    %1172 = vrot.lane.b32.xlu0 %v1170, 32
    %v1173 = vpop.permute.xlu0 %1172
    %v1175 = vadd.f32 %v1165, %v1173
    %v1176 = vtanh.pop %v1175
    %1178 = vrot.lane.b32.xlu0 %v1176, 64
    %v1179 = vpop.permute.xlu0 %1178
    %v1181 = vmul.f32 %v1163, %v1179
    %v1182 = vmul.f32 %v1181, %v844
    %1184 = vrot.lane.b32.xlu0 %v1182, 32
    %v1185 = vpop.permute.xlu0 %1184
    %v1187 = vsel %vm851, %v1185, 0.0
    %1188 = vadd.xlane.f32.xlu0 %v1187
    %v1189 = vpop.xlane.xlu0 %1188
    %v1190 = vadd.f32 %v1189, %v856
    %1192 = vset.pattern.permute.xlu0 0
    %1193 = vperm.xlu0 %1192, %v1190
    %v1194 = vpop.permute.xlu0 %1193
    %v1196 = vmul.f32 %v1194, %v768
    %v1198 = vrot.slane %v1181, 6
    %1199 = vrot.lane.b32.xlu0 %v1198, 32
    %v1200 = vpop.permute.xlu0 %1199
    %v1201 = vsel %vm100, %v1200, 0
    %1203 = vmatpush.msra.mxu0 0.0
    %1204 = vmatpush.msra.mxu0 0.0
    %1205 = vmatpush.msra.mxu0 0.0
    %1206 = vmatpush.msra.mxu0 0.0
    %1207 = vmatpush.msra.mxu0 0.0
    %1208 = vmatpush.msra.mxu0 0.0
    %1209 = vmatpush.msra.mxu0 0.0
    %1210 = vmatpush.msra.mxu0 0.0
    %1211 = vmatpush.msra.mxu0 0.0
    %1212 = vmatpush.msra.mxu0 0.0
    %1213 = vmatpush.msra.mxu0 0.0
    %1214 = vmatpush.msra.mxu0 0.0
    %1215 = vmatpush.msra.mxu0 %v61
    %1216 = vmatpush.msra.mxu0 %v60
    %1217 = vmatpush.msra.mxu0 %v59
    %1218 = vmatpush.msra.mxu0 %v58
    %1219 = vmatmul.f32.gmra.mxu0 %v1201
    %v1220 = vpop.f32.mrf.mxu0
    %v1221 = vadd.f32 0.0, %v1220
    %1222 = vdwg.mxu0
    %v1224 = vrot.slane %v1221, 2
    %v1226 = vadd.f32 %v1196, %v1224
    %v1227 = vadd.f32 %v1226, %v799
    %v1228 = vxor.u32 %v1227, 2147483648
    %v1229 = vmul.f32 %v1228, 1.442695
    %v1230 = vpow.pop %v1229
    %v1231 = vadd.f32 %v1230, 1.0
    %v1232 = vrcp.pop %v1231
    %v1233 = vmul.f32 %v1231, %v1232
    %v1234 = vsub.f32 1.0, %v1233
    %v1235 = vmul.f32 %v1232, %v1234
    %v1236 = vadd.f32 %v1232, %v1235
    %vm1237 = vweird.f32 %v1231
    %vm1238 = vweird.f32 %v1232
    %vm1239 = vmor %vm1237, %vm1238
    %v1240 = vsel %vm1239, %v1232, %v1236
    %v1241 = vand.u32 2147483647, %v1231
    %vm1242 = vcmp.eq.f32.partialorder %v1241, 8.507059e+37
    %v1243 = vand.u32 %v1231, 2147483648
    %v1244 = vor.u32 1.1754944e-38, %v1243
    %v1245 = vsel %vm1242, %v1244, %v1240
    %v1246 = vmul.f32 1.0, %v1245
    %v1247 = vtanh.pop %v1227
    %v1248 = vmul.f32 %v1246, %v1175
    %1250 = vrot.lane.b32.xlu0 %v1247, 64
    %v1251 = vpop.permute.xlu0 %1250
    %v1253 = vmul.f32 %v1246, %v1251
    %1255 = vrot.lane.b32.xlu0 %v1253, 32
    %v1256 = vpop.permute.xlu0 %1255
    %v1258 = vadd.f32 %v1248, %v1256
    %v1259 = vtanh.pop %v1258
    %1261 = vrot.lane.b32.xlu0 %v1259, 64
    %v1262 = vpop.permute.xlu0 %1261
    %v1264 = vmul.f32 %v1246, %v1262
    %v1265 = vmul.f32 %v1264, %v844
    %1267 = vrot.lane.b32.xlu0 %v1265, 32
    %v1268 = vpop.permute.xlu0 %1267
    %v1270 = vsel %vm851, %v1268, 0.0
    %1271 = vadd.xlane.f32.xlu0 %v1270
    %v1272 = vpop.xlane.xlu0 %1271
    %v1273 = vadd.f32 %v1272, %v856
    %1275 = vset.pattern.permute.xlu0 0
    %1276 = vperm.xlu0 %1275, %v1273
    %v1277 = vpop.permute.xlu0 %1276
    %v1279 = vmul.f32 %v1277, %v768
    %v1281 = vrot.slane %v1264, 6
    %1282 = vrot.lane.b32.xlu0 %v1281, 32
    %v1283 = vpop.permute.xlu0 %1282
    %v1284 = vsel %vm100, %v1283, 0
    %1286 = vmatpush.msra.mxu0 0.0
    %1287 = vmatpush.msra.mxu0 0.0
    %1288 = vmatpush.msra.mxu0 0.0
    %1289 = vmatpush.msra.mxu0 0.0
    %1290 = vmatpush.msra.mxu0 0.0
    %1291 = vmatpush.msra.mxu0 0.0
    %1292 = vmatpush.msra.mxu0 0.0
    %1293 = vmatpush.msra.mxu0 0.0
    %1294 = vmatpush.msra.mxu0 0.0
    %1295 = vmatpush.msra.mxu0 0.0
    %1296 = vmatpush.msra.mxu0 0.0
    %1297 = vmatpush.msra.mxu0 0.0
    %1298 = vmatpush.msra.mxu0 %v61
    %1299 = vmatpush.msra.mxu0 %v60
    %1300 = vmatpush.msra.mxu0 %v59
    %1301 = vmatpush.msra.mxu0 %v58
    %1302 = vmatmul.f32.gmra.mxu0 %v1284
    %v1303 = vpop.f32.mrf.mxu0
    %v1304 = vadd.f32 0.0, %v1303
    %1305 = vdwg.mxu0
    %v1307 = vrot.slane %v1304, 2
    %v1309 = vadd.f32 %v1279, %v1307
    %v1310 = vadd.f32 %v1309, %v799
    %v1311 = vxor.u32 %v1310, 2147483648
    %v1312 = vmul.f32 %v1311, 1.442695
    %v1313 = vpow.pop %v1312
    %v1314 = vadd.f32 %v1313, 1.0
    %v1315 = vrcp.pop %v1314
    %v1316 = vmul.f32 %v1314, %v1315
    %v1317 = vsub.f32 1.0, %v1316
    %v1318 = vmul.f32 %v1315, %v1317
    %v1319 = vadd.f32 %v1315, %v1318
    %vm1320 = vweird.f32 %v1314
    %vm1321 = vweird.f32 %v1315
    %vm1322 = vmor %vm1320, %vm1321
    %v1323 = vsel %vm1322, %v1315, %v1319
    %v1324 = vand.u32 2147483647, %v1314
    %vm1325 = vcmp.eq.f32.partialorder %v1324, 8.507059e+37
    %v1326 = vand.u32 %v1314, 2147483648
    %v1327 = vor.u32 1.1754944e-38, %v1326
    %v1328 = vsel %vm1325, %v1327, %v1323
    %v1329 = vmul.f32 1.0, %v1328
    %v1330 = vtanh.pop %v1310
    %v1331 = vmul.f32 %v1329, %v1258
    %1333 = vrot.lane.b32.xlu0 %v1330, 64
    %v1334 = vpop.permute.xlu0 %1333
    %v1336 = vmul.f32 %v1329, %v1334
    %1338 = vrot.lane.b32.xlu0 %v1336, 32
    %v1339 = vpop.permute.xlu0 %1338
    %v1341 = vadd.f32 %v1331, %v1339
    %v1342 = vtanh.pop %v1341
    %1344 = vrot.lane.b32.xlu0 %v1342, 64
    %v1345 = vpop.permute.xlu0 %1344
    %v1347 = vmul.f32 %v1329, %v1345
    %v1348 = vmul.f32 %v1347, %v844
    %1350 = vrot.lane.b32.xlu0 %v1348, 32
    %v1351 = vpop.permute.xlu0 %1350
    %v1353 = vsel %vm851, %v1351, 0.0
    %1354 = vadd.xlane.f32.xlu0 %v1353
    %v1355 = vpop.xlane.xlu0 %1354
    %v1356 = vadd.f32 %v1355, %v856
    %1358 = vset.pattern.permute.xlu0 0
    %1359 = vperm.xlu0 %1358, %v1356
    %v1360 = vpop.permute.xlu0 %1359
    %v1362 = vmul.f32 %v1360, %v768
    %v1364 = vrot.slane %v1347, 6
    %1365 = vrot.lane.b32.xlu0 %v1364, 32
    %v1366 = vpop.permute.xlu0 %1365
    %v1367 = vsel %vm100, %v1366, 0
    %1369 = vmatpush.msra.mxu0 0.0
    %1370 = vmatpush.msra.mxu0 0.0
    %1371 = vmatpush.msra.mxu0 0.0
    %1372 = vmatpush.msra.mxu0 0.0
    %1373 = vmatpush.msra.mxu0 0.0
    %1374 = vmatpush.msra.mxu0 0.0
    %1375 = vmatpush.msra.mxu0 0.0
    %1376 = vmatpush.msra.mxu0 0.0
    %1377 = vmatpush.msra.mxu0 0.0
    %1378 = vmatpush.msra.mxu0 0.0
    %1379 = vmatpush.msra.mxu0 0.0
    %1380 = vmatpush.msra.mxu0 0.0
    %1381 = vmatpush.msra.mxu0 %v61
    %1382 = vmatpush.msra.mxu0 %v60
    %1383 = vmatpush.msra.mxu0 %v59
    %1384 = vmatpush.msra.mxu0 %v58
    %1385 = vmatmul.f32.gmra.mxu0 %v1367
    %v1386 = vpop.f32.mrf.mxu0
    %v1387 = vadd.f32 0.0, %v1386
    %1388 = vdwg.mxu0
    %v1390 = vrot.slane %v1387, 2
    %v1392 = vadd.f32 %v1362, %v1390
    %v1393 = vadd.f32 %v1392, %v799
    %v1394 = vxor.u32 %v1393, 2147483648
    %v1395 = vmul.f32 %v1394, 1.442695
    %v1396 = vpow.pop %v1395
    %v1397 = vadd.f32 %v1396, 1.0
    %v1398 = vrcp.pop %v1397
    %v1399 = vmul.f32 %v1397, %v1398
    %v1400 = vsub.f32 1.0, %v1399
    %v1401 = vmul.f32 %v1398, %v1400
    %v1402 = vadd.f32 %v1398, %v1401
    %vm1403 = vweird.f32 %v1397
    %vm1404 = vweird.f32 %v1398
    %vm1405 = vmor %vm1403, %vm1404
    %v1406 = vsel %vm1405, %v1398, %v1402
    %v1407 = vand.u32 2147483647, %v1397
    %vm1408 = vcmp.eq.f32.partialorder %v1407, 8.507059e+37
    %v1409 = vand.u32 %v1397, 2147483648
    %v1410 = vor.u32 1.1754944e-38, %v1409
    %v1411 = vsel %vm1408, %v1410, %v1406
    %v1412 = vmul.f32 1.0, %v1411
    %v1413 = vtanh.pop %v1393
    %v1414 = vmul.f32 %v1412, %v1341
    %1416 = vrot.lane.b32.xlu0 %v1413, 64
    %v1417 = vpop.permute.xlu0 %1416
    %v1419 = vmul.f32 %v1412, %v1417
    %1421 = vrot.lane.b32.xlu0 %v1419, 32
    %v1422 = vpop.permute.xlu0 %1421
    %v1424 = vadd.f32 %v1414, %v1422
    %v1425 = vtanh.pop %v1424
    %1427 = vrot.lane.b32.xlu0 %v1425, 64
    %v1428 = vpop.permute.xlu0 %1427
    %v1430 = vmul.f32 %v1412, %v1428
    %v1431 = vmul.f32 %v1430, %v844
    %1433 = vrot.lane.b32.xlu0 %v1431, 32
    %v1434 = vpop.permute.xlu0 %1433
    %v1436 = vsel %vm851, %v1434, 0.0
    %1437 = vadd.xlane.f32.xlu0 %v1436
    %v1438 = vpop.xlane.xlu0 %1437
    %v1439 = vadd.f32 %v1438, %v856
    %1440 = vrot.lane.b32.xlu0 %v941, 1
    %v1441 = vpop.permute.xlu0 %1440
    %1443 = vrot.lane.b32.xlu0 %v1024, 2
    %v1444 = vpop.permute.xlu0 %1443
    %1446 = vrot.lane.b32.xlu0 %v1107, 3
    %v1447 = vpop.permute.xlu0 %1446
    %1449 = vrot.lane.b32.xlu0 %v1190, 4
    %v1450 = vpop.permute.xlu0 %1449
    %1452 = vrot.lane.b32.xlu0 %v1273, 5
    %v1453 = vpop.permute.xlu0 %1452
    %1455 = vrot.lane.b32.xlu0 %v1356, 6
    %v1456 = vpop.permute.xlu0 %1455
    %1459 = vrot.lane.b32.xlu0 %v1439, 7
    %v1460 = vpop.permute.xlu0 %1459
    %vm1462 = vcmask 7168
    %v1463 = vsel %vm1462, %v858, %v1441
    %vm1464 = vcmask 15360
    %v1465 = vsel %vm1464, %v1463, %v1444
    %vm1466 = vcmask 23552
    %v1467 = vsel %vm1466, %v1465, %v1447
    %v1468 = vsel %vm66, %v1467, %v1450
    %vm1469 = vcmask 39936
    %v1470 = vsel %vm1469, %v1468, %v1453
    %vm1471 = vcmask 48128
    %v1472 = vsel %vm1471, %v1470, %v1456
    %vm1473 = vcmask 56320
    %v1474 = vsel %vm1473, %v1472, %v1460
    %vm1475 = vcmask 64518
    %1476 = vst.msk [vmem:[#allocation7 - $0x6] sm:$0xc0] %vm1475, %v1474
    // Predicated region
    $region30: #{tpu_custom_call.1} parent=1 // pred_check
      _
    $region31: #{tpu_custom_call.1} parent=1 // pred_check_branch
      %1478 = sbr.rel (0) target = $region33
    $region32: #{tpu_custom_call.1} parent=1 // pred_region
      %1480 = vsyncadd [#allocation4], 0
      %s1482 = sshll.u32 [#allocation7], 4
      %s1483 = int_to_ptr.vmem [resolvable:$true] %s1482
      %s1484 = sshll.u32 %s5, 4
      %s1485 = int_to_ptr.hbm [resolvable:$true] %s1484
      %1487 = dma.vmem_to_hbm [thread:$0]  %s1483, 32, %s1485, [#allocation4]
    $region33: #{tpu_custom_call.1} parent=1 // pred_fallthru
      _
    // Predicated region
    $region34: #{tpu_custom_call.1} parent=1 // pred_check
      _
    $region35: #{tpu_custom_call.1} parent=1 // pred_check_branch
      %1489 = sbr.rel (0) target = $region37
    $region36: #{tpu_custom_call.1} parent=1 // pred_region
      %1491 = dma.done [#allocation4], 32
    $region37: #{tpu_custom_call.1} parent=1 // pred_fallthru
      _
    %1492 = vsyncpa [#allocation3], 1
    %1493 = vsyncpa [#allocation6], 1
    %1494 = vsyncpa [#allocation4], 1

</llo_original>
